<compile_context>
chip_gen: v5e
topology: v5e:2x2
jax: 0.10.0
libtpu: 0.0.40
codegen_flags: <defaults>
</compile_context>

<pallas_src>
import jax
import jax.numpy as jnp
from jax.experimental import pallas as pl
from jax.experimental.pallas import tpu as pltpu


def yun_kernel(x_ref, w_in_ref, w_c1_ref, w2_ref, w3_ref, w_out_ref, b_ref, o_ref):
    # x tile is bf16 (TILE_B, 100); all weights bf16; biases f32 packed (8, 128).
    x = x_ref[...]

    b_in = b_ref[0:1, 0:64]     # input_layer bias
    b_c1 = b_ref[1:2, 0:19]     # [control | column_1] bias
    b_2 = b_ref[2:3, 0:16]      # column_2 bias
    b_3 = b_ref[3:4, 0:16]      # column_3 bias
    b_out = b_ref[4:5, :]       # output bias, zero-padded to 128 lanes

    # input_layer + ReLU  (bf16 operands, f32 accumulation)
    h = jnp.dot(x, w_in_ref[...], preferred_element_type=jnp.float32) + b_in
    h = jnp.maximum(h, 0.0)
    h_bf = h.astype(jnp.bfloat16)

    # Fused [control_layer | column_1]: one (64,19) matmul feeds both paths.
    cz = jnp.dot(h_bf, w_c1_ref[...], preferred_element_type=jnp.float32) + b_c1
    c0 = cz[:, 0:1]
    c1 = cz[:, 1:2]
    c2 = cz[:, 2:3]
    z1 = cz[:, 3:19]            # column_1 pre-activation (before gate)

    # softmax over the 3 control logits, done columnwise on the VPU/EUP
    # (avoids a masked lane-reduce over a 3-wide array).
    m = jnp.maximum(jnp.maximum(c0, c1), c2)
    e0 = jnp.exp(c0 - m)
    e1 = jnp.exp(c1 - m)
    e2 = jnp.exp(c2 - m)
    inv = pl.reciprocal(e0 + e1 + e2, approx=True)
    g1 = e0 * inv
    g2 = e1 * inv
    g3 = e2 * inv

    # column_1 * gate1, ReLU
    y = jnp.maximum(z1 * g1, 0.0).astype(jnp.bfloat16)
    # column_2 * gate2, ReLU
    y = jnp.maximum(
        (jnp.dot(y, w2_ref[...], preferred_element_type=jnp.float32) + b_2) * g2, 0.0
    ).astype(jnp.bfloat16)
    # column_3 * gate3, ReLU
    y = jnp.maximum(
        (jnp.dot(y, w3_ref[...], preferred_element_type=jnp.float32) + b_3) * g3, 0.0
    ).astype(jnp.bfloat16)

    # output_layer (padded to 128 lanes -> unmasked stores)
    o_ref[...] = jnp.dot(y, w_out_ref[...], preferred_element_type=jnp.float32) + b_out


def pack_params(params):
    """Cast/pack PyTorch-style params into the kernel's fused bf16 layout."""
    (w_in, b_in, w_ctl, b_ctl, w1, b1, w2, b2, w3, b3, w_out, b_out) = params

    w_in_bf = w_in.astype(jnp.bfloat16)                                   # (100, 64)
    w_c1_bf = jnp.concatenate([w_ctl, w1], axis=1).astype(jnp.bfloat16)    # (64, 19)
    w2_bf = w2.astype(jnp.bfloat16)                                        # (16, 16)
    w3_bf = w3.astype(jnp.bfloat16)                                        # (16, 16)
    w_out_p = jnp.zeros((16, 128), jnp.float32).at[:, :10].set(w_out)
    w_out_bf = w_out_p.astype(jnp.bfloat16)                                # (16, 128)

    bias = jnp.zeros((8, 128), jnp.float32)
    bias = bias.at[0, :64].set(b_in[0])
    bias = bias.at[1, 0:3].set(b_ctl[0]).at[1, 3:19].set(b1[0])
    bias = bias.at[2, :16].set(b2[0])
    bias = bias.at[3, :16].set(b3[0])
    bias = bias.at[4, :10].set(b_out[0])
    return w_in_bf, w_c1_bf, w2_bf, w3_bf, w_out_bf, bias


def yun_forward(x, params, tile_b=128):
    """x: (B, 100) f32; params: PyTorch-layout tensors pre-transposed to [in, out]."""
    B = x.shape[0]
    n_blocks = pl.cdiv(B, tile_b)
    Bp = n_blocks * tile_b
    x_bf = x.astype(jnp.bfloat16)
    if Bp != B:
        x_bf = jnp.pad(x_bf, ((0, Bp - B), (0, 0)))

    w_in_bf, w_c1_bf, w2_bf, w3_bf, w_out_bf, bias = pack_params(params)

    const = lambda i: (0, 0)
    in_specs = [
        pl.BlockSpec((tile_b, 100), lambda i: (i, 0)),  # x tile streams over grid
        pl.BlockSpec((100, 64), const),                 # w_in     (VMEM-resident)
        pl.BlockSpec((64, 19), const),                  # [w_ctl | w1]
        pl.BlockSpec((16, 16), const),                  # w2
        pl.BlockSpec((16, 16), const),                  # w3
        pl.BlockSpec((16, 128), const),                 # w_out (lane-padded)
        pl.BlockSpec((8, 128), const),                  # packed biases
    ]
    out_specs = pl.BlockSpec((tile_b, 128), lambda i: (i, 0))

    # Advisory cost hint for the XLA scheduler.
    flops = 2 * Bp * (100 * 64 + 64 * 19 + 2 * 16 * 16 + 16 * 128)
    transcendentals = 4 * Bp
    weight_bytes = (100 * 64 + 64 * 19 + 2 * 16 * 16 + 16 * 128) * 2 + 8 * 128 * 4
    bytes_accessed = Bp * 100 * 2 + Bp * 128 * 4 + weight_bytes * n_blocks
    cost = pl.CostEstimate(
        flops=flops, transcendentals=transcendentals, bytes_accessed=bytes_accessed
    )

    out = pl.pallas_call(
        yun_kernel,
        out_shape=jax.ShapeDtypeStruct((Bp, 128), jnp.float32),
        grid=(n_blocks,),
        in_specs=in_specs,
        out_specs=out_specs,
        compiler_params=pltpu.CompilerParams(
            dimension_semantics=("parallel",),
        ),
        cost_estimate=cost,
    )(x_bf, w_in_bf, w_c1_bf, w2_bf, w3_bf, w_out_bf, bias)

    return out[:B, :10]


def init_linear(key, fan_in, fan_out):
    """PyTorch nn.Linear default init: U(-1/sqrt(fan_in), 1/sqrt(fan_in))."""
    kw, kb = jax.random.split(key)
    bound = 1.0 / (fan_in ** 0.5)
    # weight stored pre-transposed as [in, out]
    w = jax.random.uniform(kw, (fan_in, fan_out), jnp.float32, -bound, bound)
    b = jax.random.uniform(kb, (1, fan_out), jnp.float32, -bound, bound)
    return w, b


def reference_forward(x, params):
    """Pure-JAX reference with the same bf16-operand / f32-accumulate matmuls."""
    (w_in, b_in, w_ctl, b_ctl, w1, b1, w2, b2, w3, b3, w_out, b_out) = params

    def dot_bf16(a, w):
        return jnp.dot(a.astype(jnp.bfloat16), w.astype(jnp.bfloat16),
                       preferred_element_type=jnp.float32)

    h = jax.nn.relu(dot_bf16(x, w_in) + b_in)
    p = jax.nn.softmax(dot_bf16(h, w_ctl) + b_ctl, axis=1)
    y = jax.nn.relu((dot_bf16(h, w1) + b1) * p[:, 0:1])
    y = jax.nn.relu((dot_bf16(y, w2) + b2) * p[:, 1:2])
    y = jax.nn.relu((dot_bf16(y, w3) + b3) * p[:, 2:3])
    return dot_bf16(y, w_out) + b_out


if __name__ == "__main__":
    key = jax.random.PRNGKey(0)
    kx, k0, k1, k2, k3, k4, k5 = jax.random.split(key, 7)

    B = 256
    x = jax.random.normal(kx, (B, 100), jnp.float32)

    w_in, b_in = init_linear(k0, 100, 64)    # input_layer
    w_ctl, b_ctl = init_linear(k1, 64, 3)    # control_layer
    w1, b1 = init_linear(k2, 64, 16)         # column_1
    w2, b2 = init_linear(k3, 16, 16)         # column_2
    w3, b3 = init_linear(k4, 16, 16)         # column_3
    w_out, b_out = init_linear(k5, 16, 10)   # output_layer

    params = (w_in, b_in, w_ctl, b_ctl, w1, b1, w2, b2, w3, b3, w_out, b_out)

    out = yun_forward(x, params, tile_b=128)
    out = jax.block_until_ready(out)

    ref = reference_forward(x, params)
    assert out.shape == (B, 10)
    max_err = float(jnp.max(jnp.abs(out - ref)))
    # bf16 matmul operands + approx reciprocal in the gate softmax -> loosened tol.
    assert jnp.allclose(out, ref, atol=2e-2, rtol=2e-2), (
        f"mismatch vs reference, max abs err {max_err}")

    print("KERNEL_OK")
</pallas_src>

<mosaic_0001>
module attributes {stable_mosaic.version = 11 : i64} {
  func.func @yun_kernel(%arg0: i32, %arg1: memref<128x100xbf16, #tpu.memory_space<vmem>>, %arg2: memref<100x64xbf16, #tpu.memory_space<vmem>>, %arg3: memref<64x19xbf16, #tpu.memory_space<vmem>>, %arg4: memref<16x16xbf16, #tpu.memory_space<vmem>>, %arg5: memref<16x16xbf16, #tpu.memory_space<vmem>>, %arg6: memref<16x128xbf16, #tpu.memory_space<vmem>>, %arg7: memref<8x128xf32, #tpu.memory_space<vmem>>, %arg8: memref<128x128xf32, #tpu.memory_space<vmem>>) attributes {dimension_semantics = [#tpu.dimension_semantics<parallel>], iteration_bounds = array<i64: 2>, scalar_prefetch = 0 : i64, scratch_operands = 0 : i64, tpu.core_type = #tpu.core_type<tc>, window_params = [{transform_indices = @transform_0, window_bounds = array<i64: 128, 100>}, {pipeline_mode = #tpu.pipeline_mode<synchronous>, transform_indices = @transform_1, window_bounds = array<i64: 100, 64>}, {pipeline_mode = #tpu.pipeline_mode<synchronous>, transform_indices = @transform_2, window_bounds = array<i64: 64, 19>}, {pipeline_mode = #tpu.pipeline_mode<synchronous>, transform_indices = @transform_3, window_bounds = array<i64: 16, 16>}, {pipeline_mode = #tpu.pipeline_mode<synchronous>, transform_indices = @transform_4, window_bounds = array<i64: 16, 16>}, {pipeline_mode = #tpu.pipeline_mode<synchronous>, transform_indices = @transform_5, window_bounds = array<i64: 16, 128>}, {pipeline_mode = #tpu.pipeline_mode<synchronous>, transform_indices = @transform_6, window_bounds = array<i64: 8, 128>}, {transform_indices = @transform_7, window_bounds = array<i64: 128, 128>}]} {
    %c0 = arith.constant 0 : index
    %c0_0 = arith.constant 0 : index
    %0 = vector.load %arg1[%c0, %c0_0] : memref<128x100xbf16, #tpu.memory_space<vmem>>, vector<128x100xbf16>
    %c0_1 = arith.constant 0 : index
    %c0_2 = arith.constant 0 : index
    %1 = vector.load %arg7[%c0_1, %c0_2] : memref<8x128xf32, #tpu.memory_space<vmem>>, vector<1x64xf32>
    %c1 = arith.constant 1 : index
    %c0_3 = arith.constant 0 : index
    %2 = vector.load %arg7[%c1, %c0_3] : memref<8x128xf32, #tpu.memory_space<vmem>>, vector<1x19xf32>
    %c2 = arith.constant 2 : index
    %c0_4 = arith.constant 0 : index
    %3 = vector.load %arg7[%c2, %c0_4] : memref<8x128xf32, #tpu.memory_space<vmem>>, vector<1x16xf32>
    %c3 = arith.constant 3 : index
    %c0_5 = arith.constant 0 : index
    %4 = vector.load %arg7[%c3, %c0_5] : memref<8x128xf32, #tpu.memory_space<vmem>>, vector<1x16xf32>
    %c4 = arith.constant 4 : index
    %c0_6 = arith.constant 0 : index
    %5 = vector.load %arg7[%c4, %c0_6] : memref<8x128xf32, #tpu.memory_space<vmem>>, vector<1x128xf32>
    %c0_7 = arith.constant 0 : index
    %c0_8 = arith.constant 0 : index
    %6 = vector.load %arg2[%c0_7, %c0_8] : memref<100x64xbf16, #tpu.memory_space<vmem>>, vector<100x64xbf16>
    %cst = arith.constant dense<0.000000e+00> : vector<128x64xf32>
    %7 = tpu.matmul %0, %6, %cst {dimension_numbers = #tpu.dot_dimension_numbers<[1], [0], [0], [1], [0, 0, 1, 1], [], []>} : vector<128x100xbf16>, vector<100x64xbf16>, vector<128x64xf32> -> vector<128x64xf32>
    %8 = vector.broadcast %1 : vector<1x64xf32> to vector<128x64xf32>
    %9 = arith.addf %7, %8 : vector<128x64xf32>
    %cst_9 = arith.constant 0.000000e+00 : f32
    %10 = vector.broadcast %cst_9 : f32 to vector<128x64xf32>
    %11 = arith.maximumf %9, %10 : vector<128x64xf32>
    %12 = arith.truncf %11 : vector<128x64xf32> to vector<128x64xbf16>
    %c0_10 = arith.constant 0 : index
    %c0_11 = arith.constant 0 : index
    %13 = vector.load %arg3[%c0_10, %c0_11] : memref<64x19xbf16, #tpu.memory_space<vmem>>, vector<64x19xbf16>
    %cst_12 = arith.constant dense<0.000000e+00> : vector<128x19xf32>
    %14 = tpu.matmul %12, %13, %cst_12 {dimension_numbers = #tpu.dot_dimension_numbers<[1], [0], [0], [1], [0, 0, 1, 1], [], []>} : vector<128x64xbf16>, vector<64x19xbf16>, vector<128x19xf32> -> vector<128x19xf32>
    %15 = vector.broadcast %2 : vector<1x19xf32> to vector<128x19xf32>
    %16 = arith.addf %14, %15 : vector<128x19xf32>
    %17 = vector.extract_strided_slice %16 {offsets = [0, 0], sizes = [128, 1], strides = [1, 1]} : vector<128x19xf32> to vector<128x1xf32>
    %18 = vector.extract_strided_slice %16 {offsets = [0, 1], sizes = [128, 1], strides = [1, 1]} : vector<128x19xf32> to vector<128x1xf32>
    %19 = vector.extract_strided_slice %16 {offsets = [0, 2], sizes = [128, 1], strides = [1, 1]} : vector<128x19xf32> to vector<128x1xf32>
    %20 = vector.extract_strided_slice %16 {offsets = [0, 3], sizes = [128, 16], strides = [1, 1]} : vector<128x19xf32> to vector<128x16xf32>
    %21 = arith.maximumf %17, %18 : vector<128x1xf32>
    %22 = arith.maximumf %21, %19 : vector<128x1xf32>
    %23 = arith.subf %17, %22 : vector<128x1xf32>
    %24 = math.exp %23 : vector<128x1xf32>
    %25 = arith.subf %18, %22 : vector<128x1xf32>
    %26 = math.exp %25 : vector<128x1xf32>
    %27 = arith.subf %19, %22 : vector<128x1xf32>
    %28 = math.exp %27 : vector<128x1xf32>
    %29 = arith.addf %24, %26 : vector<128x1xf32>
    %30 = arith.addf %29, %28 : vector<128x1xf32>
    %31 = tpu.reciprocal %30 {approx = true} : vector<128x1xf32> -> vector<128x1xf32>
    %32 = arith.mulf %24, %31 : vector<128x1xf32>
    %33 = arith.mulf %26, %31 : vector<128x1xf32>
    %34 = arith.mulf %28, %31 : vector<128x1xf32>
    %35 = vector.broadcast %32 : vector<128x1xf32> to vector<128x16xf32>
    %36 = arith.mulf %20, %35 : vector<128x16xf32>
    %cst_13 = arith.constant 0.000000e+00 : f32
    %37 = vector.broadcast %cst_13 : f32 to vector<128x16xf32>
    %38 = arith.maximumf %36, %37 : vector<128x16xf32>
    %39 = arith.truncf %38 : vector<128x16xf32> to vector<128x16xbf16>
    %c0_14 = arith.constant 0 : index
    %c0_15 = arith.constant 0 : index
    %40 = vector.load %arg4[%c0_14, %c0_15] : memref<16x16xbf16, #tpu.memory_space<vmem>>, vector<16x16xbf16>
    %cst_16 = arith.constant dense<0.000000e+00> : vector<128x16xf32>
    %41 = tpu.matmul %39, %40, %cst_16 {dimension_numbers = #tpu.dot_dimension_numbers<[1], [0], [0], [1], [0, 0, 1, 1], [], []>} : vector<128x16xbf16>, vector<16x16xbf16>, vector<128x16xf32> -> vector<128x16xf32>
    %42 = vector.broadcast %3 : vector<1x16xf32> to vector<128x16xf32>
    %43 = arith.addf %41, %42 : vector<128x16xf32>
    %44 = vector.broadcast %33 : vector<128x1xf32> to vector<128x16xf32>
    %45 = arith.mulf %43, %44 : vector<128x16xf32>
    %cst_17 = arith.constant 0.000000e+00 : f32
    %46 = vector.broadcast %cst_17 : f32 to vector<128x16xf32>
    %47 = arith.maximumf %45, %46 : vector<128x16xf32>
    %48 = arith.truncf %47 : vector<128x16xf32> to vector<128x16xbf16>
    %c0_18 = arith.constant 0 : index
    %c0_19 = arith.constant 0 : index
    %49 = vector.load %arg5[%c0_18, %c0_19] : memref<16x16xbf16, #tpu.memory_space<vmem>>, vector<16x16xbf16>
    %cst_20 = arith.constant dense<0.000000e+00> : vector<128x16xf32>
    %50 = tpu.matmul %48, %49, %cst_20 {dimension_numbers = #tpu.dot_dimension_numbers<[1], [0], [0], [1], [0, 0, 1, 1], [], []>} : vector<128x16xbf16>, vector<16x16xbf16>, vector<128x16xf32> -> vector<128x16xf32>
    %51 = vector.broadcast %4 : vector<1x16xf32> to vector<128x16xf32>
    %52 = arith.addf %50, %51 : vector<128x16xf32>
    %53 = vector.broadcast %34 : vector<128x1xf32> to vector<128x16xf32>
    %54 = arith.mulf %52, %53 : vector<128x16xf32>
    %cst_21 = arith.constant 0.000000e+00 : f32
    %55 = vector.broadcast %cst_21 : f32 to vector<128x16xf32>
    %56 = arith.maximumf %54, %55 : vector<128x16xf32>
    %57 = arith.truncf %56 : vector<128x16xf32> to vector<128x16xbf16>
    %c0_22 = arith.constant 0 : index
    %c0_23 = arith.constant 0 : index
    %58 = vector.load %arg6[%c0_22, %c0_23] : memref<16x128xbf16, #tpu.memory_space<vmem>>, vector<16x128xbf16>
    %cst_24 = arith.constant dense<0.000000e+00> : vector<128x128xf32>
    %59 = tpu.matmul %57, %58, %cst_24 {dimension_numbers = #tpu.dot_dimension_numbers<[1], [0], [0], [1], [0, 0, 1, 1], [], []>} : vector<128x16xbf16>, vector<16x128xbf16>, vector<128x128xf32> -> vector<128x128xf32>
    %60 = vector.broadcast %5 : vector<1x128xf32> to vector<128x128xf32>
    %61 = arith.addf %59, %60 : vector<128x128xf32>
    %c0_25 = arith.constant 0 : index
    %c0_26 = arith.constant 0 : index
    %62 = vector.load %arg8[%c0_25, %c0_26] : memref<128x128xf32, #tpu.memory_space<vmem>>, vector<128x128xf32>
    tpu.vector_store %arg8[%c0_25, %c0_26], %61 {strides = array<i32>} : memref<128x128xf32, #tpu.memory_space<vmem>>, vector<128x128xf32>,
    return
  }
  func.func @transform_0(%arg0: i32) -> (i32, i32) {
    %c0_i32 = arith.constant 0 : i32
    %c0_i32_0 = arith.constant 0 : i32
    return %arg0, %c0_i32 : i32, i32
  }
  func.func @transform_1(%arg0: i32) -> (i32, i32) {
    %c0_i32 = arith.constant 0 : i32
    %c0_i32_0 = arith.constant 0 : i32
    %c0_i32_1 = arith.constant 0 : i32
    return %c0_i32, %c0_i32_0 : i32, i32
  }
  func.func @transform_2(%arg0: i32) -> (i32, i32) {
    %c0_i32 = arith.constant 0 : i32
    %c0_i32_0 = arith.constant 0 : i32
    %c0_i32_1 = arith.constant 0 : i32
    return %c0_i32, %c0_i32_0 : i32, i32
  }
  func.func @transform_3(%arg0: i32) -> (i32, i32) {
    %c0_i32 = arith.constant 0 : i32
    %c0_i32_0 = arith.constant 0 : i32
    %c0_i32_1 = arith.constant 0 : i32
    return %c0_i32, %c0_i32_0 : i32, i32
  }
  func.func @transform_4(%arg0: i32) -> (i32, i32) {
    %c0_i32 = arith.constant 0 : i32
    %c0_i32_0 = arith.constant 0 : i32
    %c0_i32_1 = arith.constant 0 : i32
    return %c0_i32, %c0_i32_0 : i32, i32
  }
  func.func @transform_5(%arg0: i32) -> (i32, i32) {
    %c0_i32 = arith.constant 0 : i32
    %c0_i32_0 = arith.constant 0 : i32
    %c0_i32_1 = arith.constant 0 : i32
    return %c0_i32, %c0_i32_0 : i32, i32
  }
  func.func @transform_6(%arg0: i32) -> (i32, i32) {
    %c0_i32 = arith.constant 0 : i32
    %c0_i32_0 = arith.constant 0 : i32
    %c0_i32_1 = arith.constant 0 : i32
    return %c0_i32, %c0_i32_0 : i32, i32
  }
  func.func @transform_7(%arg0: i32) -> (i32, i32) {
    %c0_i32 = arith.constant 0 : i32
    %c0_i32_0 = arith.constant 0 : i32
    return %arg0, %c0_i32 : i32, i32
  }
}

</mosaic_0001>

<llo_original>
// kernel: tpu_custom_call.1
$region0: #{tpu_custom_call.1}
  #allocation0 [shape = 'u32[]', space=smem, size = 0x4, offset = 0x4, fixed_abs, tag = 'smem constant byte address 0x4 - core index']
  #allocation1 [shape = 'u32[72,128]{1,0:T(1,128)}', space=vmem, size = 0x9000, scoped, tag = 'internal scratch']
  %s0 = inlined_call_operand.vmem [shape: bf16[256,100], index: 0, kind: input, shape index: {}]
  %s1 = inlined_call_operand.vmem [shape: bf16[100,64], index: 1, kind: input, shape index: {}]
  %s2 = inlined_call_operand.vmem [shape: bf16[64,19], index: 2, kind: input, shape index: {}]
  %s3 = inlined_call_operand.vmem [shape: bf16[16,16], index: 3, kind: input, shape index: {}]
  %s4 = inlined_call_operand.vmem [shape: bf16[16,16], index: 4, kind: input, shape index: {}]
  %s5 = inlined_call_operand.vmem [shape: bf16[16,128], index: 5, kind: input, shape index: {}]
  %s6 = inlined_call_operand.vmem [shape: f32[8,128], index: 6, kind: input, shape index: {}]
  %s7 = inlined_call_operand.hbm [shape: f32[256,128], index: 7, kind: output, shape index: {}]
  %s8 = sld [smem:[#allocation0]]
  $region61: #{tpu_custom_call.1} parent=0
    _
  %s10 = ssub.s32 1, %s8
  %s11 = scalar_select 0, %s10, %s8
  $region1: #{tpu_custom_call.1} parent=0
    #allocation2 [shape = 'u8[131072]{0}', space=vmem, size = 0x20000, scoped, tag = 'output window, operand 0']
    #allocation3 [shape = 's32[2]{0}', space=sflag, size = 0x8, scoped, tag = 'scoped memory for tpu_custom_call.1']
    %12 = vsyncpa [#allocation3], 0
    %s13 = scalar_lea.sflag [#allocation3], 1
    %14 = vsyncpa %s13, 0
    loop: start=0, step=1, limit=4
    $region2: #{tpu_custom_call.1} parent=1 // loop_pre_header
      _
    $region3: #{tpu_custom_call.1} parent=1 // loop_header
      %s16 = sphi 0, %s20
      %p17 = scmp.ge.s32.totalorder %s16, 4
      %s26 = sphi 0, %s28
      %s29 = sphi 0, %s26
      %s30 = sphi 0, %s29
      %s46 = sphi 0, %s30
      %s50 = sphi 0, %s50
      %s52 = sphi 0, %s50
      %s53 = sphi 0, %s52
      %s67 = sphi 0, %s53
      %s71 = sphi 0, %s71
      %s73 = sphi 0, %s71
      %s74 = sphi 0, %s73
      %s88 = sphi 0, %s74
      %s92 = sphi 0, %s92
      %s94 = sphi 0, %s92
      %s95 = sphi 0, %s94
      %s109 = sphi 0, %s95
      %s113 = sphi 0, %s113
      %s115 = sphi 0, %s113
      %s116 = sphi 0, %s115
      %s130 = sphi 0, %s116
      %s134 = sphi 0, %s134
      %s136 = sphi 0, %s134
      %s137 = sphi 0, %s136
      %s151 = sphi 0, %s137
      %s155 = sphi 0, %s155
      %s157 = sphi 0, %s155
      %s158 = sphi 0, %s157
      %s172 = sphi 0, %s158
      %s178 = sphi 0, %s180
      %s181 = sphi 0, %s178
      %s182 = sphi 0, %s181
      %s198 = sphi 0, %s182
    $region4: #{tpu_custom_call.1} parent=1 // loop_header_branch
      %19 = sbr.rel (%p17) target = $region8
    $region5: #{tpu_custom_call.1} parent=1 // loop_body
      %s21 = ssub.s32 %s16, 1
      %s22 = ssub.s32 %s16, 2
      %s23 = sadd.s32 %s16, 1
      %s24 = ssub.s32 %s16, %s23
      %p25 = scmp.eq.s32.totalorder %s24, 0
      %s27 = sadd.s32 %s26, 1
      %s28 = scalar_select %p25, %s26, %s27
      %p31 = pneg %p25
      %p32 = scmp.eq.s32.totalorder %s16, 1
      %p33 = por %p31, %p32
      %p34 = scmp.ne.s32.totalorder %s26, %s29
      %p35 = scmp.eq.s32.totalorder %s16, 0
      %p36 = por %p34, %p35
      %p37 = scmp.ne.s32.totalorder %s26, %s29
      %p38 = scmp.eq.s32.totalorder %s21, 1
      %p39 = por %p37, %p38
      %p40 = scmp.ne.s32.totalorder %s29, %s30
      %p41 = scmp.eq.s32.totalorder %s21, 0
      %p42 = por %p40, %p41
      %p43 = scmp.ne.s32.totalorder %s29, %s30
      %p44 = scmp.eq.s32.totalorder %s22, 1
      %p45 = por %p43, %p44
      %p47 = scmp.ne.s32.totalorder %s30, %s46
      %p48 = scmp.eq.s32.totalorder %s22, 0
      %p49 = por %p47, %p48
      %s51 = sadd.s32 %s50, 1
      %p54 = scmp.eq.s32.totalorder %s16, 1
      %p55 = scmp.ne.s32.totalorder %s50, %s52
      %p56 = scmp.eq.s32.totalorder %s16, 0
      %p57 = por %p55, %p56
      %p58 = scmp.ne.s32.totalorder %s50, %s52
      %p59 = scmp.eq.s32.totalorder %s21, 1
      %p60 = por %p58, %p59
      %p61 = scmp.ne.s32.totalorder %s52, %s53
      %p62 = scmp.eq.s32.totalorder %s21, 0
      %p63 = por %p61, %p62
      %p64 = scmp.ne.s32.totalorder %s52, %s53
      %p65 = scmp.eq.s32.totalorder %s22, 1
      %p66 = por %p64, %p65
      %p68 = scmp.ne.s32.totalorder %s53, %s67
      %p69 = scmp.eq.s32.totalorder %s22, 0
      %p70 = por %p68, %p69
      %s72 = sadd.s32 %s71, 1
      %p75 = scmp.eq.s32.totalorder %s16, 1
      %p76 = scmp.ne.s32.totalorder %s71, %s73
      %p77 = scmp.eq.s32.totalorder %s16, 0
      %p78 = por %p76, %p77
      %p79 = scmp.ne.s32.totalorder %s71, %s73
      %p80 = scmp.eq.s32.totalorder %s21, 1
      %p81 = por %p79, %p80
      %p82 = scmp.ne.s32.totalorder %s73, %s74
      %p83 = scmp.eq.s32.totalorder %s21, 0
      %p84 = por %p82, %p83
      %p85 = scmp.ne.s32.totalorder %s73, %s74
      %p86 = scmp.eq.s32.totalorder %s22, 1
      %p87 = por %p85, %p86
      %p89 = scmp.ne.s32.totalorder %s74, %s88
      %p90 = scmp.eq.s32.totalorder %s22, 0
      %p91 = por %p89, %p90
      %s93 = sadd.s32 %s92, 1
      %p96 = scmp.eq.s32.totalorder %s16, 1
      %p97 = scmp.ne.s32.totalorder %s92, %s94
      %p98 = scmp.eq.s32.totalorder %s16, 0
      %p99 = por %p97, %p98
      %p100 = scmp.ne.s32.totalorder %s92, %s94
      %p101 = scmp.eq.s32.totalorder %s21, 1
      %p102 = por %p100, %p101
      %p103 = scmp.ne.s32.totalorder %s94, %s95
      %p104 = scmp.eq.s32.totalorder %s21, 0
      %p105 = por %p103, %p104
      %p106 = scmp.ne.s32.totalorder %s94, %s95
      %p107 = scmp.eq.s32.totalorder %s22, 1
      %p108 = por %p106, %p107
      %p110 = scmp.ne.s32.totalorder %s95, %s109
      %p111 = scmp.eq.s32.totalorder %s22, 0
      %p112 = por %p110, %p111
      %s114 = sadd.s32 %s113, 1
      %p117 = scmp.eq.s32.totalorder %s16, 1
      %p118 = scmp.ne.s32.totalorder %s113, %s115
      %p119 = scmp.eq.s32.totalorder %s16, 0
      %p120 = por %p118, %p119
      %p121 = scmp.ne.s32.totalorder %s113, %s115
      %p122 = scmp.eq.s32.totalorder %s21, 1
      %p123 = por %p121, %p122
      %p124 = scmp.ne.s32.totalorder %s115, %s116
      %p125 = scmp.eq.s32.totalorder %s21, 0
      %p126 = por %p124, %p125
      %p127 = scmp.ne.s32.totalorder %s115, %s116
      %p128 = scmp.eq.s32.totalorder %s22, 1
      %p129 = por %p127, %p128
      %p131 = scmp.ne.s32.totalorder %s116, %s130
      %p132 = scmp.eq.s32.totalorder %s22, 0
      %p133 = por %p131, %p132
      %s135 = sadd.s32 %s134, 1
      %p138 = scmp.eq.s32.totalorder %s16, 1
      %p139 = scmp.ne.s32.totalorder %s134, %s136
      %p140 = scmp.eq.s32.totalorder %s16, 0
      %p141 = por %p139, %p140
      %p142 = scmp.ne.s32.totalorder %s134, %s136
      %p143 = scmp.eq.s32.totalorder %s21, 1
      %p144 = por %p142, %p143
      %p145 = scmp.ne.s32.totalorder %s136, %s137
      %p146 = scmp.eq.s32.totalorder %s21, 0
      %p147 = por %p145, %p146
      %p148 = scmp.ne.s32.totalorder %s136, %s137
      %p149 = scmp.eq.s32.totalorder %s22, 1
      %p150 = por %p148, %p149
      %p152 = scmp.ne.s32.totalorder %s137, %s151
      %p153 = scmp.eq.s32.totalorder %s22, 0
      %p154 = por %p152, %p153
      %s156 = sadd.s32 %s155, 1
      %p159 = scmp.eq.s32.totalorder %s16, 1
      %p160 = scmp.ne.s32.totalorder %s155, %s157
      %p161 = scmp.eq.s32.totalorder %s16, 0
      %p162 = por %p160, %p161
      %p163 = scmp.ne.s32.totalorder %s155, %s157
      %p164 = scmp.eq.s32.totalorder %s21, 1
      %p165 = por %p163, %p164
      %p166 = scmp.ne.s32.totalorder %s157, %s158
      %p167 = scmp.eq.s32.totalorder %s21, 0
      %p168 = por %p166, %p167
      %p169 = scmp.ne.s32.totalorder %s157, %s158
      %p170 = scmp.eq.s32.totalorder %s22, 1
      %p171 = por %p169, %p170
      %p173 = scmp.ne.s32.totalorder %s158, %s172
      %p174 = scmp.eq.s32.totalorder %s22, 0
      %p175 = por %p173, %p174
      %s176 = ssub.s32 %s16, %s23
      %p177 = scmp.eq.s32.totalorder %s176, 0
      %s179 = sadd.s32 %s178, 1
      %s180 = scalar_select %p177, %s178, %s179
      %p183 = pneg %p177
      %p184 = scmp.eq.s32.totalorder %s16, 1
      %p185 = por %p183, %p184
      %p186 = scmp.ne.s32.totalorder %s178, %s181
      %p187 = scmp.eq.s32.totalorder %s16, 0
      %p188 = por %p186, %p187
      %p189 = scmp.ne.s32.totalorder %s178, %s181
      %p190 = scmp.eq.s32.totalorder %s21, 1
      %p191 = por %p189, %p190
      %p192 = scmp.ne.s32.totalorder %s181, %s182
      %p193 = scmp.eq.s32.totalorder %s21, 0
      %p194 = por %p192, %p193
      %p195 = scmp.ne.s32.totalorder %s181, %s182
      %p196 = scmp.eq.s32.totalorder %s22, 1
      %p197 = por %p195, %p196
      %p199 = scmp.ne.s32.totalorder %s182, %s198
      %p200 = scmp.eq.s32.totalorder %s22, 0
      %p201 = por %p199, %p200
      %p202 = scmp.le.s32.totalorder 1, %s16
      %p203 = scmp.lt.s32.totalorder %s16, 3
      %p204 = pnand %p202, %p203
      %p205 = pneg %p204
      // Predicated region
      $region9: #{tpu_custom_call.1} parent=5 // pred_check
        _
      $region10: #{tpu_custom_call.1} parent=5 // pred_check_branch
        %207 = sbr.rel (%p204) target = $region12
      $region11: #{tpu_custom_call.1} parent=5 // pred_region
        %s208 = ssub.s32 %s16, 1
        // Predicated region
        $region13: #{tpu_custom_call.1} parent=11 // pred_check
          %p209 = pneg %p63
        $region14: #{tpu_custom_call.1} parent=11 // pred_check_branch
          %211 = sbr.rel (%p209) target = $region16
        $region15: #{tpu_custom_call.1} parent=11 // pred_region
          _
        $region16: #{tpu_custom_call.1} parent=11 // pred_fallthru
          _
        // Predicated region
        $region17: #{tpu_custom_call.1} parent=11 // pred_check
          %p212 = pneg %p84
        $region18: #{tpu_custom_call.1} parent=11 // pred_check_branch
          %214 = sbr.rel (%p212) target = $region20
        $region19: #{tpu_custom_call.1} parent=11 // pred_region
          _
        $region20: #{tpu_custom_call.1} parent=11 // pred_fallthru
          _
        // Predicated region
        $region21: #{tpu_custom_call.1} parent=11 // pred_check
          %p215 = pneg %p105
        $region22: #{tpu_custom_call.1} parent=11 // pred_check_branch
          %217 = sbr.rel (%p215) target = $region24
        $region23: #{tpu_custom_call.1} parent=11 // pred_region
          _
        $region24: #{tpu_custom_call.1} parent=11 // pred_fallthru
          _
        // Predicated region
        $region25: #{tpu_custom_call.1} parent=11 // pred_check
          %p218 = pneg %p126
        $region26: #{tpu_custom_call.1} parent=11 // pred_check_branch
          %220 = sbr.rel (%p218) target = $region28
        $region27: #{tpu_custom_call.1} parent=11 // pred_region
          _
        $region28: #{tpu_custom_call.1} parent=11 // pred_fallthru
          _
        // Predicated region
        $region29: #{tpu_custom_call.1} parent=11 // pred_check
          %p221 = pneg %p147
        $region30: #{tpu_custom_call.1} parent=11 // pred_check_branch
          %223 = sbr.rel (%p221) target = $region32
        $region31: #{tpu_custom_call.1} parent=11 // pred_region
          _
        $region32: #{tpu_custom_call.1} parent=11 // pred_fallthru
          _
        // Predicated region
        $region33: #{tpu_custom_call.1} parent=11 // pred_check
          %p224 = pneg %p168
        $region34: #{tpu_custom_call.1} parent=11 // pred_check_branch
          %226 = sbr.rel (%p224) target = $region36
        $region35: #{tpu_custom_call.1} parent=11 // pred_region
          _
        $region36: #{tpu_custom_call.1} parent=11 // pred_fallthru
          _
      $region12: #{tpu_custom_call.1} parent=5 // pred_fallthru
        _
      %p227 = scmp.lt.s32.totalorder %s16, 2
      // Predicated region
      $region37: #{tpu_custom_call.1} parent=5 // pred_check
        %p228 = pneg %p227
      $region38: #{tpu_custom_call.1} parent=5 // pred_check_branch
        %230 = sbr.rel (%p228) target = $region40
      $region39: #{tpu_custom_call.1} parent=5 // pred_region
        // Predicated region
        $region41: #{tpu_custom_call.1} parent=39 // pred_check
          %p231 = pneg %p36
        $region42: #{tpu_custom_call.1} parent=39 // pred_check_branch
          %233 = sbr.rel (%p231) target = $region44
        $region43: #{tpu_custom_call.1} parent=39 // pred_region
          %s234 = smul.u32 16, %s16
          %p235 = scmp.lt.s32.totalorder %s234, 31
          %s236 = scalar_select %p235, %s234, 31
          %s237 = smul.addr %s236, 4
          %s238 = scalar_lea.vmem %s0, %s237
          %s239 = smul.u32 16, %s16
        $region44: #{tpu_custom_call.1} parent=39 // pred_fallthru
          _
      $region40: #{tpu_custom_call.1} parent=5 // pred_fallthru
        _
      %p240 = scmp.le.s32.totalorder 1, %s16
      %p241 = scmp.lt.s32.totalorder %s16, 3
      %p242 = pnand %p240, %p241
      %p243 = pneg %p242
      // Predicated region
      $region45: #{tpu_custom_call.1} parent=5 // pred_check
        _
      $region46: #{tpu_custom_call.1} parent=5 // pred_check_branch
        %245 = sbr.rel (%p242) target = $region48
      $region47: #{tpu_custom_call.1} parent=5 // pred_region
        %s246 = ssub.s32 %s16, 1
        %s247 = smul.u32 16, %s21
        %p248 = scmp.lt.s32.totalorder %s247, 31
        %s249 = scalar_select %p248, %s247, 31
        %s250 = smul.addr %s249, 4
        %s251 = scalar_lea.vmem %s0, %s250
        %p252 = pneg %p42
        %p253 = pneg %p39
        %p254 = pneg %p63
        %p255 = pneg %p60
        %p256 = pneg %p84
        %p257 = pneg %p81
        %p258 = pneg %p105
        %p259 = pneg %p102
        %p260 = pneg %p126
        %p261 = pneg %p123
        %p262 = pneg %p147
        %p263 = pneg %p144
        %p264 = pneg %p168
        %p265 = pneg %p165
        %p266 = pneg %p194
        %p267 = pneg %p191
        %s268 = sand.u32 %s181, 1
        %s269 = scalar_lea.sflag [#allocation3], %s268
        %s270 = sand.u32 %s181, 1
        %s271 = smul.addr %s270, 128
        %s272 = scalar_lea.vmem [#allocation2], %s271
        %s273 = smul.u32 16, %s21
        %p274 = scmp.lt.s32.totalorder %s273, 31
        %s275 = scalar_select %p274, %s273, 31
        %s276 = smul.addr %s275, 4
        %s277 = scalar_lea.vmem %s0, %s276
        %s278 = smul.u32 16, %s21
        %s279 = smul.u32 16, %s21
        %v281 = vld [vmem:[%s277] sm:$0xf]
        %v282 = vld [vmem:[%s277 + $0x4] sm:$0xf]
        %v283 = vld [vmem:[%s277 + $0x8] sm:$0xf]
        %v284 = vld [vmem:[%s277 + $0xc] sm:$0xf]
        %v285 = vld [vmem:[%s277 + $0x10] sm:$0xf]
        %v286 = vld [vmem:[%s277 + $0x14] sm:$0xf]
        %v287 = vld [vmem:[%s277 + $0x18] sm:$0xf]
        %v288 = vld [vmem:[%s277 + $0x1c] sm:$0xf]
        %v289 = vld [vmem:[%s277 + $0x20] sm:$0xf]
        %v290 = vld [vmem:[%s277 + $0x24] sm:$0xf]
        %v291 = vld [vmem:[%s277 + $0x28] sm:$0xf]
        %v292 = vld [vmem:[%s277 + $0x2c] sm:$0xf]
        %v293 = vld [vmem:[%s277 + $0x30] sm:$0xf]
        %v294 = vld [vmem:[%s277 + $0x34] sm:$0xf]
        %v295 = vld [vmem:[%s277 + $0x38] sm:$0xf]
        %v296 = vld [vmem:[%s277 + $0x3c] sm:$0xf]
        %v297 = vld [vmem:[%s6] sm:$0x1]
        %v298 = vld [vmem:[%s6 + $0x1] sm:$0x1]
        %v299 = vld [vmem:[%s6 + $0x2] sm:$0x1]
        %v300 = vld [vmem:[%s6 + $0x3] sm:$0x1]
        %v301 = vld [vmem:[%s6 + $0x4] sm:$0x1]
        %v302 = vld [vmem:[%s1] sm:$0xf]
        %v303 = vld [vmem:[%s1 + $0x4] sm:$0xf]
        %v304 = vld [vmem:[%s1 + $0x8] sm:$0xf]
        %v305 = vld [vmem:[%s1 + $0xc] sm:$0xf]
        %v306 = vld [vmem:[%s1 + $0x10] sm:$0xf]
        %v307 = vld [vmem:[%s1 + $0x14] sm:$0xf]
        %v308 = vld [vmem:[%s1 + $0x18] sm:$0xf]
        %v309 = vld [vmem:[%s1 + $0x1c] sm:$0xf]
        %v310 = vld [vmem:[%s1 + $0x20] sm:$0xf]
        %v311 = vld [vmem:[%s1 + $0x24] sm:$0xf]
        %v312 = vld [vmem:[%s1 + $0x28] sm:$0xf]
        %v313 = vld [vmem:[%s1 + $0x2c] sm:$0xf]
        %v314 = vld [vmem:[%s1 + $0x30] sm:$0x3]
        %v315 = vperm.slane %v297, 0
        %v332 = vunpack.c.l.b16 %v281
        %v333 = vunpack.c.l.b16 %v282
        %v334 = vunpack.c.l.b16 %v283
        %v335 = vunpack.c.l.b16 %v284
        %v336 = vunpack.c.l.b16 %v285
        %v337 = vunpack.c.l.b16 %v286
        %v338 = vunpack.c.l.b16 %v287
        %v339 = vunpack.c.l.b16 %v288
        %v340 = vunpack.c.l.b16 %v289
        %v341 = vunpack.c.l.b16 %v290
        %v342 = vunpack.c.l.b16 %v291
        %v343 = vunpack.c.l.b16 %v292
        %v344 = vunpack.c.l.b16 %v293
        %v345 = vunpack.c.l.b16 %v294
        %v346 = vunpack.c.l.b16 %v295
        %v347 = vunpack.c.l.b16 %v296
        %v348 = vpack.c.b16 %v333, %v332
        %v349 = vpack.c.b16 %v335, %v334
        %v350 = vpack.c.b16 %v337, %v336
        %v351 = vpack.c.b16 %v339, %v338
        %v352 = vpack.c.b16 %v341, %v340
        %v353 = vpack.c.b16 %v343, %v342
        %v354 = vpack.c.b16 %v345, %v344
        %v355 = vpack.c.b16 %v347, %v346
        %v369 = vunpack.c.l.b16 %v302
        %v370 = vunpack.c.l.b16 %v303
        %v371 = vunpack.c.l.b16 %v304
        %v372 = vunpack.c.l.b16 %v305
        %v373 = vunpack.c.l.b16 %v306
        %v374 = vunpack.c.l.b16 %v307
        %v375 = vunpack.c.l.b16 %v308
        %v376 = vunpack.c.l.b16 %v309
        %v377 = vunpack.c.l.b16 %v310
        %v378 = vunpack.c.l.b16 %v311
        %v379 = vunpack.c.l.b16 %v312
        %v380 = vunpack.c.l.b16 %v313
        %v381 = vunpack.c.l.b16 %v314
        %v382 = vpack.c.b16 %v370, %v369
        %v383 = vpack.c.b16 %v372, %v371
        %v384 = vpack.c.b16 %v374, %v373
        %v385 = vpack.c.b16 %v376, %v375
        %v386 = vpack.c.b16 %v378, %v377
        %v387 = vpack.c.b16 %v380, %v379
        %v388 = vpack.c.b16 %v381, %v381
        %vm395 = vcmask 818176
        %v397 = vsel %vm395, %v348, 0
        %v400 = vsel %vm395, %v349, 0
        %v403 = vsel %vm395, %v350, 0
        %v406 = vsel %vm395, %v351, 0
        %v409 = vsel %vm395, %v352, 0
        %v412 = vsel %vm395, %v353, 0
        %v415 = vsel %vm395, %v354, 0
        %v418 = vsel %vm395, %v355, 0
        %vm420 = vcmask 1041408
        %v422 = vsel %vm420, %v388, 0
        %424 = vmatpush.bf16.msra.mxu0 0
        %425 = vmatpush.bf16.msra.mxu0 %v422
        %426 = vmatpush.bf16.msra.mxu0 %v387
        %427 = vmatpush.bf16.msra.mxu0 %v386
        %428 = vmatpush.bf16.msra.mxu0 %v385
        %429 = vmatpush.bf16.msra.mxu0 %v384
        %430 = vmatpush.bf16.msra.mxu0 %v383
        %431 = vmatpush.bf16.msra.mxu0 %v382
        %432 = vmatmul.bf16.gmra.mxu0 %v397
        %v433 = vpop.f32.mrf.mxu0
        %v434 = vadd.f32 %v315, %v433
        %v435 = vpop.f32.mrf.mxu0
        %v436 = vadd.f32 %v315, %v435
        %437 = vmatmul.bf16.gmra.mxu0 %v400
        %v438 = vpop.f32.mrf.mxu0
        %v439 = vadd.f32 %v315, %v438
        %v440 = vpop.f32.mrf.mxu0
        %v441 = vadd.f32 %v315, %v440
        %442 = vmatmul.bf16.gmra.mxu0 %v403
        %v443 = vpop.f32.mrf.mxu0
        %v444 = vadd.f32 %v315, %v443
        %v445 = vpop.f32.mrf.mxu0
        %v446 = vadd.f32 %v315, %v445
        %447 = vmatmul.bf16.gmra.mxu0 %v406
        %v448 = vpop.f32.mrf.mxu0
        %v449 = vadd.f32 %v315, %v448
        %v450 = vpop.f32.mrf.mxu0
        %v451 = vadd.f32 %v315, %v450
        %452 = vmatmul.bf16.gmra.mxu0 %v409
        %v453 = vpop.f32.mrf.mxu0
        %v454 = vadd.f32 %v315, %v453
        %v455 = vpop.f32.mrf.mxu0
        %v456 = vadd.f32 %v315, %v455
        %457 = vmatmul.bf16.gmra.mxu0 %v412
        %v458 = vpop.f32.mrf.mxu0
        %v459 = vadd.f32 %v315, %v458
        %v460 = vpop.f32.mrf.mxu0
        %v461 = vadd.f32 %v315, %v460
        %462 = vmatmul.bf16.gmra.mxu0 %v415
        %v463 = vpop.f32.mrf.mxu0
        %v464 = vadd.f32 %v315, %v463
        %v465 = vpop.f32.mrf.mxu0
        %v466 = vadd.f32 %v315, %v465
        %467 = vmatmul.bf16.gmra.mxu0 %v418
        %v468 = vpop.f32.mrf.mxu0
        %v469 = vadd.f32 %v315, %v468
        %v470 = vpop.f32.mrf.mxu0
        %v471 = vadd.f32 %v315, %v470
        %472 = vdwg.mxu0
        %v473 = vmax.f32 %v434, 0.0
        %v474 = vmax.f32 %v436, 0.0
        %v475 = vmax.f32 %v439, 0.0
        %v476 = vmax.f32 %v441, 0.0
        %v477 = vmax.f32 %v444, 0.0
        %v478 = vmax.f32 %v446, 0.0
        %v479 = vmax.f32 %v449, 0.0
        %v480 = vmax.f32 %v451, 0.0
        %v481 = vmax.f32 %v454, 0.0
        %v482 = vmax.f32 %v456, 0.0
        %v483 = vmax.f32 %v459, 0.0
        %v484 = vmax.f32 %v461, 0.0
        %v485 = vmax.f32 %v464, 0.0
        %v486 = vmax.f32 %v466, 0.0
        %v487 = vmax.f32 %v469, 0.0
        %v488 = vmax.f32 %v471, 0.0
        %v489 = vpack.c.bf16 %v474, %v473
        %v490 = vpack.c.bf16 %v476, %v475
        %v491 = vpack.c.bf16 %v478, %v477
        %v492 = vpack.c.bf16 %v480, %v479
        %v493 = vpack.c.bf16 %v482, %v481
        %v494 = vpack.c.bf16 %v484, %v483
        %v495 = vpack.c.bf16 %v486, %v485
        %v496 = vpack.c.bf16 %v488, %v487
        %v497 = vld [vmem:[%s2] sm:$0xf]
        %v498 = vld [vmem:[%s2 + $0x4] sm:$0xf]
        %v499 = vld [vmem:[%s2 + $0x8] sm:$0xf]
        %v500 = vld [vmem:[%s2 + $0xc] sm:$0xf]
        %v501 = vld [vmem:[%s2 + $0x10] sm:$0xf]
        %v502 = vld [vmem:[%s2 + $0x14] sm:$0xf]
        %v503 = vld [vmem:[%s2 + $0x18] sm:$0xf]
        %v504 = vld [vmem:[%s2 + $0x1c] sm:$0xf]
        %v505 = vperm.slane %v298, 0
        %v514 = vunpack.c.l.b16 %v497
        %v515 = vunpack.c.l.b16 %v498
        %v516 = vunpack.c.l.b16 %v499
        %v517 = vunpack.c.l.b16 %v500
        %v518 = vunpack.c.l.b16 %v501
        %v519 = vunpack.c.l.b16 %v502
        %v520 = vunpack.c.l.b16 %v503
        %v521 = vunpack.c.l.b16 %v504
        %v522 = vpack.c.b16 %v515, %v514
        %v523 = vpack.c.b16 %v517, %v516
        %v524 = vpack.c.b16 %v519, %v518
        %v525 = vpack.c.b16 %v521, %v520
        %vm530 = vcmask 523264
        %v532 = vsel %vm530, %v489, 0
        %v535 = vsel %vm530, %v490, 0
        %v538 = vsel %vm530, %v491, 0
        %v541 = vsel %vm530, %v492, 0
        %v544 = vsel %vm530, %v493, 0
        %v547 = vsel %vm530, %v494, 0
        %v550 = vsel %vm530, %v495, 0
        %v553 = vsel %vm530, %v496, 0
        %555 = vmatpush.bf16.msra.mxu0 0
        %556 = vmatpush.bf16.msra.mxu0 0
        %557 = vmatpush.bf16.msra.mxu0 0
        %558 = vmatpush.bf16.msra.mxu0 0
        %559 = vmatpush.bf16.msra.mxu0 %v525
        %560 = vmatpush.bf16.msra.mxu0 %v524
        %561 = vmatpush.bf16.msra.mxu0 %v523
        %562 = vmatpush.bf16.msra.mxu0 %v522
        %563 = vmatmul.bf16.gmra.mxu0 %v532
        %v564 = vpop.f32.mrf.mxu0
        %v565 = vadd.f32 %v505, %v564
        %v566 = vpop.f32.mrf.mxu0
        %v567 = vadd.f32 %v505, %v566
        %568 = vmatmul.bf16.gmra.mxu0 %v535
        %v569 = vpop.f32.mrf.mxu0
        %v570 = vadd.f32 %v505, %v569
        %v571 = vpop.f32.mrf.mxu0
        %v572 = vadd.f32 %v505, %v571
        %573 = vmatmul.bf16.gmra.mxu0 %v538
        %v574 = vpop.f32.mrf.mxu0
        %v575 = vadd.f32 %v505, %v574
        %v576 = vpop.f32.mrf.mxu0
        %v577 = vadd.f32 %v505, %v576
        %578 = vmatmul.bf16.gmra.mxu0 %v541
        %v579 = vpop.f32.mrf.mxu0
        %v580 = vadd.f32 %v505, %v579
        %v581 = vpop.f32.mrf.mxu0
        %v582 = vadd.f32 %v505, %v581
        %583 = vmatmul.bf16.gmra.mxu0 %v544
        %v584 = vpop.f32.mrf.mxu0
        %v585 = vadd.f32 %v505, %v584
        %v586 = vpop.f32.mrf.mxu0
        %v587 = vadd.f32 %v505, %v586
        %588 = vmatmul.bf16.gmra.mxu0 %v547
        %v589 = vpop.f32.mrf.mxu0
        %v590 = vadd.f32 %v505, %v589
        %v591 = vpop.f32.mrf.mxu0
        %v592 = vadd.f32 %v505, %v591
        %593 = vmatmul.bf16.gmra.mxu0 %v550
        %v594 = vpop.f32.mrf.mxu0
        %v595 = vadd.f32 %v505, %v594
        %v596 = vpop.f32.mrf.mxu0
        %v597 = vadd.f32 %v505, %v596
        %598 = vmatmul.bf16.gmra.mxu0 %v553
        %v599 = vpop.f32.mrf.mxu0
        %v600 = vadd.f32 %v505, %v599
        %v601 = vpop.f32.mrf.mxu0
        %v602 = vadd.f32 %v505, %v601
        %603 = vdwg.mxu0
        %620 = vrot.lane.b32.xlu0 %v565, 127
        %v621 = vpop.permute.xlu0 %620
        %622 = vrot.lane.b32.xlu0 %v567, 127
        %v623 = vpop.permute.xlu0 %622
        %624 = vrot.lane.b32.xlu0 %v570, 127
        %v625 = vpop.permute.xlu0 %624
        %626 = vrot.lane.b32.xlu0 %v572, 127
        %v627 = vpop.permute.xlu0 %626
        %628 = vrot.lane.b32.xlu0 %v575, 127
        %v629 = vpop.permute.xlu0 %628
        %630 = vrot.lane.b32.xlu0 %v577, 127
        %v631 = vpop.permute.xlu0 %630
        %632 = vrot.lane.b32.xlu0 %v580, 127
        %v633 = vpop.permute.xlu0 %632
        %634 = vrot.lane.b32.xlu0 %v582, 127
        %v635 = vpop.permute.xlu0 %634
        %636 = vrot.lane.b32.xlu0 %v585, 127
        %v637 = vpop.permute.xlu0 %636
        %638 = vrot.lane.b32.xlu0 %v587, 127
        %v639 = vpop.permute.xlu0 %638
        %640 = vrot.lane.b32.xlu0 %v590, 127
        %v641 = vpop.permute.xlu0 %640
        %642 = vrot.lane.b32.xlu0 %v592, 127
        %v643 = vpop.permute.xlu0 %642
        %644 = vrot.lane.b32.xlu0 %v595, 127
        %v645 = vpop.permute.xlu0 %644
        %646 = vrot.lane.b32.xlu0 %v597, 127
        %v647 = vpop.permute.xlu0 %646
        %648 = vrot.lane.b32.xlu0 %v600, 127
        %v649 = vpop.permute.xlu0 %648
        %650 = vrot.lane.b32.xlu0 %v602, 127
        %v651 = vpop.permute.xlu0 %650
        %v668 = vmax.f32 %v565, %v621
        %v669 = vmax.f32 %v567, %v623
        %v670 = vmax.f32 %v570, %v625
        %v671 = vmax.f32 %v572, %v627
        %v672 = vmax.f32 %v575, %v629
        %v673 = vmax.f32 %v577, %v631
        %v674 = vmax.f32 %v580, %v633
        %v675 = vmax.f32 %v582, %v635
        %v676 = vmax.f32 %v585, %v637
        %v677 = vmax.f32 %v587, %v639
        %v678 = vmax.f32 %v590, %v641
        %v679 = vmax.f32 %v592, %v643
        %v680 = vmax.f32 %v595, %v645
        %v681 = vmax.f32 %v597, %v647
        %v682 = vmax.f32 %v600, %v649
        %v683 = vmax.f32 %v602, %v651
        %684 = vrot.lane.b32.xlu0 %v565, 126
        %v685 = vpop.permute.xlu0 %684
        %686 = vrot.lane.b32.xlu0 %v567, 126
        %v687 = vpop.permute.xlu0 %686
        %688 = vrot.lane.b32.xlu0 %v570, 126
        %v689 = vpop.permute.xlu0 %688
        %690 = vrot.lane.b32.xlu0 %v572, 126
        %v691 = vpop.permute.xlu0 %690
        %692 = vrot.lane.b32.xlu0 %v575, 126
        %v693 = vpop.permute.xlu0 %692
        %694 = vrot.lane.b32.xlu0 %v577, 126
        %v695 = vpop.permute.xlu0 %694
        %696 = vrot.lane.b32.xlu0 %v580, 126
        %v697 = vpop.permute.xlu0 %696
        %698 = vrot.lane.b32.xlu0 %v582, 126
        %v699 = vpop.permute.xlu0 %698
        %700 = vrot.lane.b32.xlu0 %v585, 126
        %v701 = vpop.permute.xlu0 %700
        %702 = vrot.lane.b32.xlu0 %v587, 126
        %v703 = vpop.permute.xlu0 %702
        %704 = vrot.lane.b32.xlu0 %v590, 126
        %v705 = vpop.permute.xlu0 %704
        %706 = vrot.lane.b32.xlu0 %v592, 126
        %v707 = vpop.permute.xlu0 %706
        %708 = vrot.lane.b32.xlu0 %v595, 126
        %v709 = vpop.permute.xlu0 %708
        %710 = vrot.lane.b32.xlu0 %v597, 126
        %v711 = vpop.permute.xlu0 %710
        %712 = vrot.lane.b32.xlu0 %v600, 126
        %v713 = vpop.permute.xlu0 %712
        %714 = vrot.lane.b32.xlu0 %v602, 126
        %v715 = vpop.permute.xlu0 %714
        %v732 = vmax.f32 %v668, %v685
        %v733 = vmax.f32 %v669, %v687
        %v734 = vmax.f32 %v670, %v689
        %v735 = vmax.f32 %v671, %v691
        %v736 = vmax.f32 %v672, %v693
        %v737 = vmax.f32 %v673, %v695
        %v738 = vmax.f32 %v674, %v697
        %v739 = vmax.f32 %v675, %v699
        %v740 = vmax.f32 %v676, %v701
        %v741 = vmax.f32 %v677, %v703
        %v742 = vmax.f32 %v678, %v705
        %v743 = vmax.f32 %v679, %v707
        %v744 = vmax.f32 %v680, %v709
        %v745 = vmax.f32 %v681, %v711
        %v746 = vmax.f32 %v682, %v713
        %v747 = vmax.f32 %v683, %v715
        %v748 = vsub.f32 %v565, %v732
        %v749 = vsub.f32 %v567, %v733
        %v750 = vsub.f32 %v570, %v734
        %v751 = vsub.f32 %v572, %v735
        %v752 = vsub.f32 %v575, %v736
        %v753 = vsub.f32 %v577, %v737
        %v754 = vsub.f32 %v580, %v738
        %v755 = vsub.f32 %v582, %v739
        %v756 = vsub.f32 %v585, %v740
        %v757 = vsub.f32 %v587, %v741
        %v758 = vsub.f32 %v590, %v742
        %v759 = vsub.f32 %v592, %v743
        %v760 = vsub.f32 %v595, %v744
        %v761 = vsub.f32 %v597, %v745
        %v762 = vsub.f32 %v600, %v746
        %v763 = vsub.f32 %v602, %v747
        %v764 = vmul.f32 %v748, 1.442695
        %v765 = vpow.pop %v764
        %v766 = vmul.f32 %v749, 1.442695
        %v767 = vpow.pop %v766
        %v768 = vmul.f32 %v750, 1.442695
        %v769 = vpow.pop %v768
        %v770 = vmul.f32 %v751, 1.442695
        %v771 = vpow.pop %v770
        %v772 = vmul.f32 %v752, 1.442695
        %v773 = vpow.pop %v772
        %v774 = vmul.f32 %v753, 1.442695
        %v775 = vpow.pop %v774
        %v776 = vmul.f32 %v754, 1.442695
        %v777 = vpow.pop %v776
        %v778 = vmul.f32 %v755, 1.442695
        %v779 = vpow.pop %v778
        %v780 = vmul.f32 %v756, 1.442695
        %v781 = vpow.pop %v780
        %v782 = vmul.f32 %v757, 1.442695
        %v783 = vpow.pop %v782
        %v784 = vmul.f32 %v758, 1.442695
        %v785 = vpow.pop %v784
        %v786 = vmul.f32 %v759, 1.442695
        %v787 = vpow.pop %v786
        %v788 = vmul.f32 %v760, 1.442695
        %v789 = vpow.pop %v788
        %v790 = vmul.f32 %v761, 1.442695
        %v791 = vpow.pop %v790
        %v792 = vmul.f32 %v762, 1.442695
        %v793 = vpow.pop %v792
        %v794 = vmul.f32 %v763, 1.442695
        %v795 = vpow.pop %v794
        %812 = vrot.lane.b32.xlu0 %v732, 1
        %v813 = vpop.permute.xlu0 %812
        %814 = vrot.lane.b32.xlu0 %v733, 1
        %v815 = vpop.permute.xlu0 %814
        %816 = vrot.lane.b32.xlu0 %v734, 1
        %v817 = vpop.permute.xlu0 %816
        %818 = vrot.lane.b32.xlu0 %v735, 1
        %v819 = vpop.permute.xlu0 %818
        %820 = vrot.lane.b32.xlu0 %v736, 1
        %v821 = vpop.permute.xlu0 %820
        %822 = vrot.lane.b32.xlu0 %v737, 1
        %v823 = vpop.permute.xlu0 %822
        %824 = vrot.lane.b32.xlu0 %v738, 1
        %v825 = vpop.permute.xlu0 %824
        %826 = vrot.lane.b32.xlu0 %v739, 1
        %v827 = vpop.permute.xlu0 %826
        %828 = vrot.lane.b32.xlu0 %v740, 1
        %v829 = vpop.permute.xlu0 %828
        %830 = vrot.lane.b32.xlu0 %v741, 1
        %v831 = vpop.permute.xlu0 %830
        %832 = vrot.lane.b32.xlu0 %v742, 1
        %v833 = vpop.permute.xlu0 %832
        %834 = vrot.lane.b32.xlu0 %v743, 1
        %v835 = vpop.permute.xlu0 %834
        %836 = vrot.lane.b32.xlu0 %v744, 1
        %v837 = vpop.permute.xlu0 %836
        %838 = vrot.lane.b32.xlu0 %v745, 1
        %v839 = vpop.permute.xlu0 %838
        %840 = vrot.lane.b32.xlu0 %v746, 1
        %v841 = vpop.permute.xlu0 %840
        %842 = vrot.lane.b32.xlu0 %v747, 1
        %v843 = vpop.permute.xlu0 %842
        %v860 = vsub.f32 %v565, %v813
        %v861 = vsub.f32 %v567, %v815
        %v862 = vsub.f32 %v570, %v817
        %v863 = vsub.f32 %v572, %v819
        %v864 = vsub.f32 %v575, %v821
        %v865 = vsub.f32 %v577, %v823
        %v866 = vsub.f32 %v580, %v825
        %v867 = vsub.f32 %v582, %v827
        %v868 = vsub.f32 %v585, %v829
        %v869 = vsub.f32 %v587, %v831
        %v870 = vsub.f32 %v590, %v833
        %v871 = vsub.f32 %v592, %v835
        %v872 = vsub.f32 %v595, %v837
        %v873 = vsub.f32 %v597, %v839
        %v874 = vsub.f32 %v600, %v841
        %v875 = vsub.f32 %v602, %v843
        %v876 = vmul.f32 %v860, 1.442695
        %v877 = vpow.pop %v876
        %v878 = vmul.f32 %v861, 1.442695
        %v879 = vpow.pop %v878
        %v880 = vmul.f32 %v862, 1.442695
        %v881 = vpow.pop %v880
        %v882 = vmul.f32 %v863, 1.442695
        %v883 = vpow.pop %v882
        %v884 = vmul.f32 %v864, 1.442695
        %v885 = vpow.pop %v884
        %v886 = vmul.f32 %v865, 1.442695
        %v887 = vpow.pop %v886
        %v888 = vmul.f32 %v866, 1.442695
        %v889 = vpow.pop %v888
        %v890 = vmul.f32 %v867, 1.442695
        %v891 = vpow.pop %v890
        %v892 = vmul.f32 %v868, 1.442695
        %v893 = vpow.pop %v892
        %v894 = vmul.f32 %v869, 1.442695
        %v895 = vpow.pop %v894
        %v896 = vmul.f32 %v870, 1.442695
        %v897 = vpow.pop %v896
        %v898 = vmul.f32 %v871, 1.442695
        %v899 = vpow.pop %v898
        %v900 = vmul.f32 %v872, 1.442695
        %v901 = vpow.pop %v900
        %v902 = vmul.f32 %v873, 1.442695
        %v903 = vpow.pop %v902
        %v904 = vmul.f32 %v874, 1.442695
        %v905 = vpow.pop %v904
        %v906 = vmul.f32 %v875, 1.442695
        %v907 = vpow.pop %v906
        %908 = vrot.lane.b32.xlu0 %v732, 2
        %v909 = vpop.permute.xlu0 %908
        %910 = vrot.lane.b32.xlu0 %v733, 2
        %v911 = vpop.permute.xlu0 %910
        %912 = vrot.lane.b32.xlu0 %v734, 2
        %v913 = vpop.permute.xlu0 %912
        %914 = vrot.lane.b32.xlu0 %v735, 2
        %v915 = vpop.permute.xlu0 %914
        %916 = vrot.lane.b32.xlu0 %v736, 2
        %v917 = vpop.permute.xlu0 %916
        %918 = vrot.lane.b32.xlu0 %v737, 2
        %v919 = vpop.permute.xlu0 %918
        %920 = vrot.lane.b32.xlu0 %v738, 2
        %v921 = vpop.permute.xlu0 %920
        %922 = vrot.lane.b32.xlu0 %v739, 2
        %v923 = vpop.permute.xlu0 %922
        %924 = vrot.lane.b32.xlu0 %v740, 2
        %v925 = vpop.permute.xlu0 %924
        %926 = vrot.lane.b32.xlu0 %v741, 2
        %v927 = vpop.permute.xlu0 %926
        %928 = vrot.lane.b32.xlu0 %v742, 2
        %v929 = vpop.permute.xlu0 %928
        %930 = vrot.lane.b32.xlu0 %v743, 2
        %v931 = vpop.permute.xlu0 %930
        %932 = vrot.lane.b32.xlu0 %v744, 2
        %v933 = vpop.permute.xlu0 %932
        %934 = vrot.lane.b32.xlu0 %v745, 2
        %v935 = vpop.permute.xlu0 %934
        %936 = vrot.lane.b32.xlu0 %v746, 2
        %v937 = vpop.permute.xlu0 %936
        %938 = vrot.lane.b32.xlu0 %v747, 2
        %v939 = vpop.permute.xlu0 %938
        %v956 = vsub.f32 %v565, %v909
        %v957 = vsub.f32 %v567, %v911
        %v958 = vsub.f32 %v570, %v913
        %v959 = vsub.f32 %v572, %v915
        %v960 = vsub.f32 %v575, %v917
        %v961 = vsub.f32 %v577, %v919
        %v962 = vsub.f32 %v580, %v921
        %v963 = vsub.f32 %v582, %v923
        %v964 = vsub.f32 %v585, %v925
        %v965 = vsub.f32 %v587, %v927
        %v966 = vsub.f32 %v590, %v929
        %v967 = vsub.f32 %v592, %v931
        %v968 = vsub.f32 %v595, %v933
        %v969 = vsub.f32 %v597, %v935
        %v970 = vsub.f32 %v600, %v937
        %v971 = vsub.f32 %v602, %v939
        %v972 = vmul.f32 %v956, 1.442695
        %v973 = vpow.pop %v972
        %v974 = vmul.f32 %v957, 1.442695
        %v975 = vpow.pop %v974
        %v976 = vmul.f32 %v958, 1.442695
        %v977 = vpow.pop %v976
        %v978 = vmul.f32 %v959, 1.442695
        %v979 = vpow.pop %v978
        %v980 = vmul.f32 %v960, 1.442695
        %v981 = vpow.pop %v980
        %v982 = vmul.f32 %v961, 1.442695
        %v983 = vpow.pop %v982
        %v984 = vmul.f32 %v962, 1.442695
        %v985 = vpow.pop %v984
        %v986 = vmul.f32 %v963, 1.442695
        %v987 = vpow.pop %v986
        %v988 = vmul.f32 %v964, 1.442695
        %v989 = vpow.pop %v988
        %v990 = vmul.f32 %v965, 1.442695
        %v991 = vpow.pop %v990
        %v992 = vmul.f32 %v966, 1.442695
        %v993 = vpow.pop %v992
        %v994 = vmul.f32 %v967, 1.442695
        %v995 = vpow.pop %v994
        %v996 = vmul.f32 %v968, 1.442695
        %v997 = vpow.pop %v996
        %v998 = vmul.f32 %v969, 1.442695
        %v999 = vpow.pop %v998
        %v1000 = vmul.f32 %v970, 1.442695
        %v1001 = vpow.pop %v1000
        %v1002 = vmul.f32 %v971, 1.442695
        %v1003 = vpow.pop %v1002
        %1020 = vrot.lane.b32.xlu0 %v877, 127
        %v1021 = vpop.permute.xlu0 %1020
        %1022 = vrot.lane.b32.xlu0 %v879, 127
        %v1023 = vpop.permute.xlu0 %1022
        %1024 = vrot.lane.b32.xlu0 %v881, 127
        %v1025 = vpop.permute.xlu0 %1024
        %1026 = vrot.lane.b32.xlu0 %v883, 127
        %v1027 = vpop.permute.xlu0 %1026
        %1028 = vrot.lane.b32.xlu0 %v885, 127
        %v1029 = vpop.permute.xlu0 %1028
        %1030 = vrot.lane.b32.xlu0 %v887, 127
        %v1031 = vpop.permute.xlu0 %1030
        %1032 = vrot.lane.b32.xlu0 %v889, 127
        %v1033 = vpop.permute.xlu0 %1032
        %1034 = vrot.lane.b32.xlu0 %v891, 127
        %v1035 = vpop.permute.xlu0 %1034
        %1036 = vrot.lane.b32.xlu0 %v893, 127
        %v1037 = vpop.permute.xlu0 %1036
        %1038 = vrot.lane.b32.xlu0 %v895, 127
        %v1039 = vpop.permute.xlu0 %1038
        %1040 = vrot.lane.b32.xlu0 %v897, 127
        %v1041 = vpop.permute.xlu0 %1040
        %1042 = vrot.lane.b32.xlu0 %v899, 127
        %v1043 = vpop.permute.xlu0 %1042
        %1044 = vrot.lane.b32.xlu0 %v901, 127
        %v1045 = vpop.permute.xlu0 %1044
        %1046 = vrot.lane.b32.xlu0 %v903, 127
        %v1047 = vpop.permute.xlu0 %1046
        %1048 = vrot.lane.b32.xlu0 %v905, 127
        %v1049 = vpop.permute.xlu0 %1048
        %1050 = vrot.lane.b32.xlu0 %v907, 127
        %v1051 = vpop.permute.xlu0 %1050
        %v1068 = vadd.f32 %v765, %v1021
        %v1069 = vadd.f32 %v767, %v1023
        %v1070 = vadd.f32 %v769, %v1025
        %v1071 = vadd.f32 %v771, %v1027
        %v1072 = vadd.f32 %v773, %v1029
        %v1073 = vadd.f32 %v775, %v1031
        %v1074 = vadd.f32 %v777, %v1033
        %v1075 = vadd.f32 %v779, %v1035
        %v1076 = vadd.f32 %v781, %v1037
        %v1077 = vadd.f32 %v783, %v1039
        %v1078 = vadd.f32 %v785, %v1041
        %v1079 = vadd.f32 %v787, %v1043
        %v1080 = vadd.f32 %v789, %v1045
        %v1081 = vadd.f32 %v791, %v1047
        %v1082 = vadd.f32 %v793, %v1049
        %v1083 = vadd.f32 %v795, %v1051
        %1100 = vrot.lane.b32.xlu0 %v973, 126
        %v1101 = vpop.permute.xlu0 %1100
        %1102 = vrot.lane.b32.xlu0 %v975, 126
        %v1103 = vpop.permute.xlu0 %1102
        %1104 = vrot.lane.b32.xlu0 %v977, 126
        %v1105 = vpop.permute.xlu0 %1104
        %1106 = vrot.lane.b32.xlu0 %v979, 126
        %v1107 = vpop.permute.xlu0 %1106
        %1108 = vrot.lane.b32.xlu0 %v981, 126
        %v1109 = vpop.permute.xlu0 %1108
        %1110 = vrot.lane.b32.xlu0 %v983, 126
        %v1111 = vpop.permute.xlu0 %1110
        %1112 = vrot.lane.b32.xlu0 %v985, 126
        %v1113 = vpop.permute.xlu0 %1112
        %1114 = vrot.lane.b32.xlu0 %v987, 126
        %v1115 = vpop.permute.xlu0 %1114
        %1116 = vrot.lane.b32.xlu0 %v989, 126
        %v1117 = vpop.permute.xlu0 %1116
        %1118 = vrot.lane.b32.xlu0 %v991, 126
        %v1119 = vpop.permute.xlu0 %1118
        %1120 = vrot.lane.b32.xlu0 %v993, 126
        %v1121 = vpop.permute.xlu0 %1120
        %1122 = vrot.lane.b32.xlu0 %v995, 126
        %v1123 = vpop.permute.xlu0 %1122
        %1124 = vrot.lane.b32.xlu0 %v997, 126
        %v1125 = vpop.permute.xlu0 %1124
        %1126 = vrot.lane.b32.xlu0 %v999, 126
        %v1127 = vpop.permute.xlu0 %1126
        %1128 = vrot.lane.b32.xlu0 %v1001, 126
        %v1129 = vpop.permute.xlu0 %1128
        %1130 = vrot.lane.b32.xlu0 %v1003, 126
        %v1131 = vpop.permute.xlu0 %1130
        %v1148 = vadd.f32 %v1068, %v1101
        %v1149 = vadd.f32 %v1069, %v1103
        %v1150 = vadd.f32 %v1070, %v1105
        %v1151 = vadd.f32 %v1071, %v1107
        %v1152 = vadd.f32 %v1072, %v1109
        %v1153 = vadd.f32 %v1073, %v1111
        %v1154 = vadd.f32 %v1074, %v1113
        %v1155 = vadd.f32 %v1075, %v1115
        %v1156 = vadd.f32 %v1076, %v1117
        %v1157 = vadd.f32 %v1077, %v1119
        %v1158 = vadd.f32 %v1078, %v1121
        %v1159 = vadd.f32 %v1079, %v1123
        %v1160 = vadd.f32 %v1080, %v1125
        %v1161 = vadd.f32 %v1081, %v1127
        %v1162 = vadd.f32 %v1082, %v1129
        %v1163 = vadd.f32 %v1083, %v1131
        %v1164 = vrcp.pop %v1148
        %v1165 = vrcp.pop %v1149
        %v1166 = vrcp.pop %v1150
        %v1167 = vrcp.pop %v1151
        %v1168 = vrcp.pop %v1152
        %v1169 = vrcp.pop %v1153
        %v1170 = vrcp.pop %v1154
        %v1171 = vrcp.pop %v1155
        %v1172 = vrcp.pop %v1156
        %v1173 = vrcp.pop %v1157
        %v1174 = vrcp.pop %v1158
        %v1175 = vrcp.pop %v1159
        %v1176 = vrcp.pop %v1160
        %v1177 = vrcp.pop %v1161
        %v1178 = vrcp.pop %v1162
        %v1179 = vrcp.pop %v1163
        %v1180 = vmul.f32 %v765, %v1164
        %v1181 = vmul.f32 %v767, %v1165
        %v1182 = vmul.f32 %v769, %v1166
        %v1183 = vmul.f32 %v771, %v1167
        %v1184 = vmul.f32 %v773, %v1168
        %v1185 = vmul.f32 %v775, %v1169
        %v1186 = vmul.f32 %v777, %v1170
        %v1187 = vmul.f32 %v779, %v1171
        %v1188 = vmul.f32 %v781, %v1172
        %v1189 = vmul.f32 %v783, %v1173
        %v1190 = vmul.f32 %v785, %v1174
        %v1191 = vmul.f32 %v787, %v1175
        %v1192 = vmul.f32 %v789, %v1176
        %v1193 = vmul.f32 %v791, %v1177
        %v1194 = vmul.f32 %v793, %v1178
        %v1195 = vmul.f32 %v795, %v1179
        %1212 = vrot.lane.b32.xlu0 %v1164, 1
        %v1213 = vpop.permute.xlu0 %1212
        %1214 = vrot.lane.b32.xlu0 %v1165, 1
        %v1215 = vpop.permute.xlu0 %1214
        %1216 = vrot.lane.b32.xlu0 %v1166, 1
        %v1217 = vpop.permute.xlu0 %1216
        %1218 = vrot.lane.b32.xlu0 %v1167, 1
        %v1219 = vpop.permute.xlu0 %1218
        %1220 = vrot.lane.b32.xlu0 %v1168, 1
        %v1221 = vpop.permute.xlu0 %1220
        %1222 = vrot.lane.b32.xlu0 %v1169, 1
        %v1223 = vpop.permute.xlu0 %1222
        %1224 = vrot.lane.b32.xlu0 %v1170, 1
        %v1225 = vpop.permute.xlu0 %1224
        %1226 = vrot.lane.b32.xlu0 %v1171, 1
        %v1227 = vpop.permute.xlu0 %1226
        %1228 = vrot.lane.b32.xlu0 %v1172, 1
        %v1229 = vpop.permute.xlu0 %1228
        %1230 = vrot.lane.b32.xlu0 %v1173, 1
        %v1231 = vpop.permute.xlu0 %1230
        %1232 = vrot.lane.b32.xlu0 %v1174, 1
        %v1233 = vpop.permute.xlu0 %1232
        %1234 = vrot.lane.b32.xlu0 %v1175, 1
        %v1235 = vpop.permute.xlu0 %1234
        %1236 = vrot.lane.b32.xlu0 %v1176, 1
        %v1237 = vpop.permute.xlu0 %1236
        %1238 = vrot.lane.b32.xlu0 %v1177, 1
        %v1239 = vpop.permute.xlu0 %1238
        %1240 = vrot.lane.b32.xlu0 %v1178, 1
        %v1241 = vpop.permute.xlu0 %1240
        %1242 = vrot.lane.b32.xlu0 %v1179, 1
        %v1243 = vpop.permute.xlu0 %1242
        %v1260 = vmul.f32 %v877, %v1213
        %v1261 = vmul.f32 %v879, %v1215
        %v1262 = vmul.f32 %v881, %v1217
        %v1263 = vmul.f32 %v883, %v1219
        %v1264 = vmul.f32 %v885, %v1221
        %v1265 = vmul.f32 %v887, %v1223
        %v1266 = vmul.f32 %v889, %v1225
        %v1267 = vmul.f32 %v891, %v1227
        %v1268 = vmul.f32 %v893, %v1229
        %v1269 = vmul.f32 %v895, %v1231
        %v1270 = vmul.f32 %v897, %v1233
        %v1271 = vmul.f32 %v899, %v1235
        %v1272 = vmul.f32 %v901, %v1237
        %v1273 = vmul.f32 %v903, %v1239
        %v1274 = vmul.f32 %v905, %v1241
        %v1275 = vmul.f32 %v907, %v1243
        %1276 = vrot.lane.b32.xlu0 %v1164, 2
        %v1277 = vpop.permute.xlu0 %1276
        %1278 = vrot.lane.b32.xlu0 %v1165, 2
        %v1279 = vpop.permute.xlu0 %1278
        %1280 = vrot.lane.b32.xlu0 %v1166, 2
        %v1281 = vpop.permute.xlu0 %1280
        %1282 = vrot.lane.b32.xlu0 %v1167, 2
        %v1283 = vpop.permute.xlu0 %1282
        %1284 = vrot.lane.b32.xlu0 %v1168, 2
        %v1285 = vpop.permute.xlu0 %1284
        %1286 = vrot.lane.b32.xlu0 %v1169, 2
        %v1287 = vpop.permute.xlu0 %1286
        %1288 = vrot.lane.b32.xlu0 %v1170, 2
        %v1289 = vpop.permute.xlu0 %1288
        %1290 = vrot.lane.b32.xlu0 %v1171, 2
        %v1291 = vpop.permute.xlu0 %1290
        %1292 = vrot.lane.b32.xlu0 %v1172, 2
        %v1293 = vpop.permute.xlu0 %1292
        %1294 = vrot.lane.b32.xlu0 %v1173, 2
        %v1295 = vpop.permute.xlu0 %1294
        %1296 = vrot.lane.b32.xlu0 %v1174, 2
        %v1297 = vpop.permute.xlu0 %1296
        %1298 = vrot.lane.b32.xlu0 %v1175, 2
        %v1299 = vpop.permute.xlu0 %1298
        %1300 = vrot.lane.b32.xlu0 %v1176, 2
        %v1301 = vpop.permute.xlu0 %1300
        %1302 = vrot.lane.b32.xlu0 %v1177, 2
        %v1303 = vpop.permute.xlu0 %1302
        %1304 = vrot.lane.b32.xlu0 %v1178, 2
        %v1305 = vpop.permute.xlu0 %1304
        %1306 = vrot.lane.b32.xlu0 %v1179, 2
        %v1307 = vpop.permute.xlu0 %1306
        %v1324 = vmul.f32 %v973, %v1277
        %v1325 = vmul.f32 %v975, %v1279
        %v1326 = vmul.f32 %v977, %v1281
        %v1327 = vmul.f32 %v979, %v1283
        %v1328 = vmul.f32 %v981, %v1285
        %v1329 = vmul.f32 %v983, %v1287
        %v1330 = vmul.f32 %v985, %v1289
        %v1331 = vmul.f32 %v987, %v1291
        %v1332 = vmul.f32 %v989, %v1293
        %v1333 = vmul.f32 %v991, %v1295
        %v1334 = vmul.f32 %v993, %v1297
        %v1335 = vmul.f32 %v995, %v1299
        %v1336 = vmul.f32 %v997, %v1301
        %v1337 = vmul.f32 %v999, %v1303
        %v1338 = vmul.f32 %v1001, %v1305
        %v1339 = vmul.f32 %v1003, %v1307
        %1341 = vset.pattern.permute.xlu0 0
        %1342 = vperm.xlu0 %1341, %v1180
        %v1343 = vpop.permute.xlu0 %1342
        %1346 = vset.pattern.permute.xlu0 0
        %1347 = vperm.xlu0 %1346, %v1181
        %v1348 = vpop.permute.xlu0 %1347
        %1351 = vset.pattern.permute.xlu0 0
        %1352 = vperm.xlu0 %1351, %v1182
        %v1353 = vpop.permute.xlu0 %1352
        %1356 = vset.pattern.permute.xlu0 0
        %1357 = vperm.xlu0 %1356, %v1183
        %v1358 = vpop.permute.xlu0 %1357
        %1361 = vset.pattern.permute.xlu0 0
        %1362 = vperm.xlu0 %1361, %v1184
        %v1363 = vpop.permute.xlu0 %1362
        %1366 = vset.pattern.permute.xlu0 0
        %1367 = vperm.xlu0 %1366, %v1185
        %v1368 = vpop.permute.xlu0 %1367
        %1371 = vset.pattern.permute.xlu0 0
        %1372 = vperm.xlu0 %1371, %v1186
        %v1373 = vpop.permute.xlu0 %1372
        %1376 = vset.pattern.permute.xlu0 0
        %1377 = vperm.xlu0 %1376, %v1187
        %v1378 = vpop.permute.xlu0 %1377
        %1381 = vset.pattern.permute.xlu0 0
        %1382 = vperm.xlu0 %1381, %v1188
        %v1383 = vpop.permute.xlu0 %1382
        %1386 = vset.pattern.permute.xlu0 0
        %1387 = vperm.xlu0 %1386, %v1189
        %v1388 = vpop.permute.xlu0 %1387
        %1391 = vset.pattern.permute.xlu0 0
        %1392 = vperm.xlu0 %1391, %v1190
        %v1393 = vpop.permute.xlu0 %1392
        %1396 = vset.pattern.permute.xlu0 0
        %1397 = vperm.xlu0 %1396, %v1191
        %v1398 = vpop.permute.xlu0 %1397
        %1401 = vset.pattern.permute.xlu0 0
        %1402 = vperm.xlu0 %1401, %v1192
        %v1403 = vpop.permute.xlu0 %1402
        %1406 = vset.pattern.permute.xlu0 0
        %1407 = vperm.xlu0 %1406, %v1193
        %v1408 = vpop.permute.xlu0 %1407
        %1411 = vset.pattern.permute.xlu0 0
        %1412 = vperm.xlu0 %1411, %v1194
        %v1413 = vpop.permute.xlu0 %1412
        %1416 = vset.pattern.permute.xlu0 0
        %1417 = vperm.xlu0 %1416, %v1195
        %v1418 = vpop.permute.xlu0 %1417
        %v1420 = vmul.f32 %v565, %v1343
        %v1421 = vmul.f32 %v567, %v1348
        %v1422 = vmul.f32 %v570, %v1353
        %v1423 = vmul.f32 %v572, %v1358
        %v1424 = vmul.f32 %v575, %v1363
        %v1425 = vmul.f32 %v577, %v1368
        %v1426 = vmul.f32 %v580, %v1373
        %v1427 = vmul.f32 %v582, %v1378
        %v1428 = vmul.f32 %v585, %v1383
        %v1429 = vmul.f32 %v587, %v1388
        %v1430 = vmul.f32 %v590, %v1393
        %v1431 = vmul.f32 %v592, %v1398
        %v1432 = vmul.f32 %v595, %v1403
        %v1433 = vmul.f32 %v597, %v1408
        %v1434 = vmul.f32 %v600, %v1413
        %v1435 = vmul.f32 %v602, %v1418
        %v1436 = vmax.f32 %v1420, 0.0
        %v1437 = vmax.f32 %v1421, 0.0
        %v1438 = vmax.f32 %v1422, 0.0
        %v1439 = vmax.f32 %v1423, 0.0
        %v1440 = vmax.f32 %v1424, 0.0
        %v1441 = vmax.f32 %v1425, 0.0
        %v1442 = vmax.f32 %v1426, 0.0
        %v1443 = vmax.f32 %v1427, 0.0
        %v1444 = vmax.f32 %v1428, 0.0
        %v1445 = vmax.f32 %v1429, 0.0
        %v1446 = vmax.f32 %v1430, 0.0
        %v1447 = vmax.f32 %v1431, 0.0
        %v1448 = vmax.f32 %v1432, 0.0
        %v1449 = vmax.f32 %v1433, 0.0
        %v1450 = vmax.f32 %v1434, 0.0
        %v1451 = vmax.f32 %v1435, 0.0
        %v1452 = vpack.c.bf16 %v1437, %v1436
        %v1453 = vpack.c.bf16 %v1439, %v1438
        %v1454 = vpack.c.bf16 %v1441, %v1440
        %v1455 = vpack.c.bf16 %v1443, %v1442
        %v1456 = vpack.c.bf16 %v1445, %v1444
        %v1457 = vpack.c.bf16 %v1447, %v1446
        %v1458 = vpack.c.bf16 %v1449, %v1448
        %v1459 = vpack.c.bf16 %v1451, %v1450
        %v1460 = vld [vmem:[%s3] sm:$0xf]
        %v1461 = vld [vmem:[%s3 + $0x4] sm:$0xf]
        %v1462 = vperm.slane %v299, 0
        %1471 = vrot.lane.b32.xlu0 %v1452, 125
        %v1472 = vpop.permute.xlu0 %1471
        %1473 = vrot.lane.b32.xlu0 %v1453, 125
        %v1474 = vpop.permute.xlu0 %1473
        %1475 = vrot.lane.b32.xlu0 %v1454, 125
        %v1476 = vpop.permute.xlu0 %1475
        %1477 = vrot.lane.b32.xlu0 %v1455, 125
        %v1478 = vpop.permute.xlu0 %1477
        %1479 = vrot.lane.b32.xlu0 %v1456, 125
        %v1480 = vpop.permute.xlu0 %1479
        %1481 = vrot.lane.b32.xlu0 %v1457, 125
        %v1482 = vpop.permute.xlu0 %1481
        %1483 = vrot.lane.b32.xlu0 %v1458, 125
        %v1484 = vpop.permute.xlu0 %1483
        %1485 = vrot.lane.b32.xlu0 %v1459, 125
        %v1486 = vpop.permute.xlu0 %1485
        %v1489 = vunpack.c.l.b16 %v1460
        %v1490 = vunpack.c.l.b16 %v1461
        %v1491 = vpack.c.b16 %v1490, %v1489
        %vm1493 = vcmask 130048
        %v1495 = vsel %vm1493, %v1472, 0
        %v1498 = vsel %vm1493, %v1474, 0
        %v1501 = vsel %vm1493, %v1476, 0
        %v1504 = vsel %vm1493, %v1478, 0
        %v1507 = vsel %vm1493, %v1480, 0
        %v1510 = vsel %vm1493, %v1482, 0
        %v1513 = vsel %vm1493, %v1484, 0
        %v1516 = vsel %vm1493, %v1486, 0
        %1518 = vmatpush.bf16.msra.mxu0 0
        %1519 = vmatpush.bf16.msra.mxu0 0
        %1520 = vmatpush.bf16.msra.mxu0 0
        %1521 = vmatpush.bf16.msra.mxu0 0
        %1522 = vmatpush.bf16.msra.mxu0 0
        %1523 = vmatpush.bf16.msra.mxu0 0
        %1524 = vmatpush.bf16.msra.mxu0 0
        %1525 = vmatpush.bf16.msra.mxu0 %v1491
        %1526 = vmatmul.bf16.gmra.mxu0 %v1495
        %v1527 = vpop.f32.mrf.mxu0
        %v1528 = vadd.f32 %v1462, %v1527
        %v1529 = vpop.f32.mrf.mxu0
        %v1530 = vadd.f32 %v1462, %v1529
        %1531 = vmatmul.bf16.gmra.mxu0 %v1498
        %v1532 = vpop.f32.mrf.mxu0
        %v1533 = vadd.f32 %v1462, %v1532
        %v1534 = vpop.f32.mrf.mxu0
        %v1535 = vadd.f32 %v1462, %v1534
        %1536 = vmatmul.bf16.gmra.mxu0 %v1501
        %v1537 = vpop.f32.mrf.mxu0
        %v1538 = vadd.f32 %v1462, %v1537
        %v1539 = vpop.f32.mrf.mxu0
        %v1540 = vadd.f32 %v1462, %v1539
        %1541 = vmatmul.bf16.gmra.mxu0 %v1504
        %v1542 = vpop.f32.mrf.mxu0
        %v1543 = vadd.f32 %v1462, %v1542
        %v1544 = vpop.f32.mrf.mxu0
        %v1545 = vadd.f32 %v1462, %v1544
        %1546 = vmatmul.bf16.gmra.mxu0 %v1507
        %v1547 = vpop.f32.mrf.mxu0
        %v1548 = vadd.f32 %v1462, %v1547
        %v1549 = vpop.f32.mrf.mxu0
        %v1550 = vadd.f32 %v1462, %v1549
        %1551 = vmatmul.bf16.gmra.mxu0 %v1510
        %v1552 = vpop.f32.mrf.mxu0
        %v1553 = vadd.f32 %v1462, %v1552
        %v1554 = vpop.f32.mrf.mxu0
        %v1555 = vadd.f32 %v1462, %v1554
        %1556 = vmatmul.bf16.gmra.mxu0 %v1513
        %v1557 = vpop.f32.mrf.mxu0
        %v1558 = vadd.f32 %v1462, %v1557
        %v1559 = vpop.f32.mrf.mxu0
        %v1560 = vadd.f32 %v1462, %v1559
        %1561 = vmatmul.bf16.gmra.mxu0 %v1516
        %v1562 = vpop.f32.mrf.mxu0
        %v1563 = vadd.f32 %v1462, %v1562
        %v1564 = vpop.f32.mrf.mxu0
        %v1565 = vadd.f32 %v1462, %v1564
        %1566 = vdwg.mxu0
        %1568 = vset.pattern.permute.xlu0 1
        %1569 = vperm.xlu0 %1568, %v1260
        %v1570 = vpop.permute.xlu0 %1569
        %1573 = vset.pattern.permute.xlu0 1
        %1574 = vperm.xlu0 %1573, %v1261
        %v1575 = vpop.permute.xlu0 %1574
        %1578 = vset.pattern.permute.xlu0 1
        %1579 = vperm.xlu0 %1578, %v1262
        %v1580 = vpop.permute.xlu0 %1579
        %1583 = vset.pattern.permute.xlu0 1
        %1584 = vperm.xlu0 %1583, %v1263
        %v1585 = vpop.permute.xlu0 %1584
        %1588 = vset.pattern.permute.xlu0 1
        %1589 = vperm.xlu0 %1588, %v1264
        %v1590 = vpop.permute.xlu0 %1589
        %1593 = vset.pattern.permute.xlu0 1
        %1594 = vperm.xlu0 %1593, %v1265
        %v1595 = vpop.permute.xlu0 %1594
        %1598 = vset.pattern.permute.xlu0 1
        %1599 = vperm.xlu0 %1598, %v1266
        %v1600 = vpop.permute.xlu0 %1599
        %1603 = vset.pattern.permute.xlu0 1
        %1604 = vperm.xlu0 %1603, %v1267
        %v1605 = vpop.permute.xlu0 %1604
        %1608 = vset.pattern.permute.xlu0 1
        %1609 = vperm.xlu0 %1608, %v1268
        %v1610 = vpop.permute.xlu0 %1609
        %1613 = vset.pattern.permute.xlu0 1
        %1614 = vperm.xlu0 %1613, %v1269
        %v1615 = vpop.permute.xlu0 %1614
        %1618 = vset.pattern.permute.xlu0 1
        %1619 = vperm.xlu0 %1618, %v1270
        %v1620 = vpop.permute.xlu0 %1619
        %1623 = vset.pattern.permute.xlu0 1
        %1624 = vperm.xlu0 %1623, %v1271
        %v1625 = vpop.permute.xlu0 %1624
        %1628 = vset.pattern.permute.xlu0 1
        %1629 = vperm.xlu0 %1628, %v1272
        %v1630 = vpop.permute.xlu0 %1629
        %1633 = vset.pattern.permute.xlu0 1
        %1634 = vperm.xlu0 %1633, %v1273
        %v1635 = vpop.permute.xlu0 %1634
        %1638 = vset.pattern.permute.xlu0 1
        %1639 = vperm.xlu0 %1638, %v1274
        %v1640 = vpop.permute.xlu0 %1639
        %1643 = vset.pattern.permute.xlu0 1
        %1644 = vperm.xlu0 %1643, %v1275
        %v1645 = vpop.permute.xlu0 %1644
        %v1647 = vmul.f32 %v1528, %v1570
        %v1648 = vmul.f32 %v1530, %v1575
        %v1649 = vmul.f32 %v1533, %v1580
        %v1650 = vmul.f32 %v1535, %v1585
        %v1651 = vmul.f32 %v1538, %v1590
        %v1652 = vmul.f32 %v1540, %v1595
        %v1653 = vmul.f32 %v1543, %v1600
        %v1654 = vmul.f32 %v1545, %v1605
        %v1655 = vmul.f32 %v1548, %v1610
        %v1656 = vmul.f32 %v1550, %v1615
        %v1657 = vmul.f32 %v1553, %v1620
        %v1658 = vmul.f32 %v1555, %v1625
        %v1659 = vmul.f32 %v1558, %v1630
        %v1660 = vmul.f32 %v1560, %v1635
        %v1661 = vmul.f32 %v1563, %v1640
        %v1662 = vmul.f32 %v1565, %v1645
        %v1663 = vmax.f32 %v1647, 0.0
        %v1664 = vmax.f32 %v1648, 0.0
        %v1665 = vmax.f32 %v1649, 0.0
        %v1666 = vmax.f32 %v1650, 0.0
        %v1667 = vmax.f32 %v1651, 0.0
        %v1668 = vmax.f32 %v1652, 0.0
        %v1669 = vmax.f32 %v1653, 0.0
        %v1670 = vmax.f32 %v1654, 0.0
        %v1671 = vmax.f32 %v1655, 0.0
        %v1672 = vmax.f32 %v1656, 0.0
        %v1673 = vmax.f32 %v1657, 0.0
        %v1674 = vmax.f32 %v1658, 0.0
        %v1675 = vmax.f32 %v1659, 0.0
        %v1676 = vmax.f32 %v1660, 0.0
        %v1677 = vmax.f32 %v1661, 0.0
        %v1678 = vmax.f32 %v1662, 0.0
        %v1679 = vpack.c.bf16 %v1664, %v1663
        %v1680 = vpack.c.bf16 %v1666, %v1665
        %v1681 = vpack.c.bf16 %v1668, %v1667
        %v1682 = vpack.c.bf16 %v1670, %v1669
        %v1683 = vpack.c.bf16 %v1672, %v1671
        %v1684 = vpack.c.bf16 %v1674, %v1673
        %v1685 = vpack.c.bf16 %v1676, %v1675
        %v1686 = vpack.c.bf16 %v1678, %v1677
        %v1687 = vld [vmem:[%s4] sm:$0xf]
        %v1688 = vld [vmem:[%s4 + $0x4] sm:$0xf]
        %v1689 = vperm.slane %v300, 0
        %v1692 = vunpack.c.l.b16 %v1687
        %v1693 = vunpack.c.l.b16 %v1688
        %v1694 = vpack.c.b16 %v1693, %v1692
        %v1697 = vsel %vm1493, %v1679, 0
        %v1700 = vsel %vm1493, %v1680, 0
        %v1703 = vsel %vm1493, %v1681, 0
        %v1706 = vsel %vm1493, %v1682, 0
        %v1709 = vsel %vm1493, %v1683, 0
        %v1712 = vsel %vm1493, %v1684, 0
        %v1715 = vsel %vm1493, %v1685, 0
        %v1718 = vsel %vm1493, %v1686, 0
        %1720 = vmatpush.bf16.msra.mxu0 0
        %1721 = vmatpush.bf16.msra.mxu0 0
        %1722 = vmatpush.bf16.msra.mxu0 0
        %1723 = vmatpush.bf16.msra.mxu0 0
        %1724 = vmatpush.bf16.msra.mxu0 0
        %1725 = vmatpush.bf16.msra.mxu0 0
        %1726 = vmatpush.bf16.msra.mxu0 0
        %1727 = vmatpush.bf16.msra.mxu0 %v1694
        %1728 = vmatmul.bf16.gmra.mxu0 %v1697
        %v1729 = vpop.f32.mrf.mxu0
        %v1730 = vadd.f32 %v1689, %v1729
        %v1731 = vpop.f32.mrf.mxu0
        %v1732 = vadd.f32 %v1689, %v1731
        %1733 = vmatmul.bf16.gmra.mxu0 %v1700
        %v1734 = vpop.f32.mrf.mxu0
        %v1735 = vadd.f32 %v1689, %v1734
        %v1736 = vpop.f32.mrf.mxu0
        %v1737 = vadd.f32 %v1689, %v1736
        %1738 = vmatmul.bf16.gmra.mxu0 %v1703
        %v1739 = vpop.f32.mrf.mxu0
        %v1740 = vadd.f32 %v1689, %v1739
        %v1741 = vpop.f32.mrf.mxu0
        %v1742 = vadd.f32 %v1689, %v1741
        %1743 = vmatmul.bf16.gmra.mxu0 %v1706
        %v1744 = vpop.f32.mrf.mxu0
        %v1745 = vadd.f32 %v1689, %v1744
        %v1746 = vpop.f32.mrf.mxu0
        %v1747 = vadd.f32 %v1689, %v1746
        %1748 = vmatmul.bf16.gmra.mxu0 %v1709
        %v1749 = vpop.f32.mrf.mxu0
        %v1750 = vadd.f32 %v1689, %v1749
        %v1751 = vpop.f32.mrf.mxu0
        %v1752 = vadd.f32 %v1689, %v1751
        %1753 = vmatmul.bf16.gmra.mxu0 %v1712
        %v1754 = vpop.f32.mrf.mxu0
        %v1755 = vadd.f32 %v1689, %v1754
        %v1756 = vpop.f32.mrf.mxu0
        %v1757 = vadd.f32 %v1689, %v1756
        %1758 = vmatmul.bf16.gmra.mxu0 %v1715
        %v1759 = vpop.f32.mrf.mxu0
        %v1760 = vadd.f32 %v1689, %v1759
        %v1761 = vpop.f32.mrf.mxu0
        %v1762 = vadd.f32 %v1689, %v1761
        %1763 = vmatmul.bf16.gmra.mxu0 %v1718
        %v1764 = vpop.f32.mrf.mxu0
        %v1765 = vadd.f32 %v1689, %v1764
        %v1766 = vpop.f32.mrf.mxu0
        %v1767 = vadd.f32 %v1689, %v1766
        %1768 = vdwg.mxu0
        %1770 = vset.pattern.permute.xlu0 2
        %1771 = vperm.xlu0 %1770, %v1324
        %v1772 = vpop.permute.xlu0 %1771
        %1775 = vset.pattern.permute.xlu0 2
        %1776 = vperm.xlu0 %1775, %v1325
        %v1777 = vpop.permute.xlu0 %1776
        %1780 = vset.pattern.permute.xlu0 2
        %1781 = vperm.xlu0 %1780, %v1326
        %v1782 = vpop.permute.xlu0 %1781
        %1785 = vset.pattern.permute.xlu0 2
        %1786 = vperm.xlu0 %1785, %v1327
        %v1787 = vpop.permute.xlu0 %1786
        %1790 = vset.pattern.permute.xlu0 2
        %1791 = vperm.xlu0 %1790, %v1328
        %v1792 = vpop.permute.xlu0 %1791
        %1795 = vset.pattern.permute.xlu0 2
        %1796 = vperm.xlu0 %1795, %v1329
        %v1797 = vpop.permute.xlu0 %1796
        %1800 = vset.pattern.permute.xlu0 2
        %1801 = vperm.xlu0 %1800, %v1330
        %v1802 = vpop.permute.xlu0 %1801
        %1805 = vset.pattern.permute.xlu0 2
        %1806 = vperm.xlu0 %1805, %v1331
        %v1807 = vpop.permute.xlu0 %1806
        %1810 = vset.pattern.permute.xlu0 2
        %1811 = vperm.xlu0 %1810, %v1332
        %v1812 = vpop.permute.xlu0 %1811
        %1815 = vset.pattern.permute.xlu0 2
        %1816 = vperm.xlu0 %1815, %v1333
        %v1817 = vpop.permute.xlu0 %1816
        %1820 = vset.pattern.permute.xlu0 2
        %1821 = vperm.xlu0 %1820, %v1334
        %v1822 = vpop.permute.xlu0 %1821
        %1825 = vset.pattern.permute.xlu0 2
        %1826 = vperm.xlu0 %1825, %v1335
        %v1827 = vpop.permute.xlu0 %1826
        %1830 = vset.pattern.permute.xlu0 2
        %1831 = vperm.xlu0 %1830, %v1336
        %v1832 = vpop.permute.xlu0 %1831
        %1835 = vset.pattern.permute.xlu0 2
        %1836 = vperm.xlu0 %1835, %v1337
        %v1837 = vpop.permute.xlu0 %1836
        %1840 = vset.pattern.permute.xlu0 2
        %1841 = vperm.xlu0 %1840, %v1338
        %v1842 = vpop.permute.xlu0 %1841
        %1845 = vset.pattern.permute.xlu0 2
        %1846 = vperm.xlu0 %1845, %v1339
        %v1847 = vpop.permute.xlu0 %1846
        %v1849 = vmul.f32 %v1730, %v1772
        %v1850 = vmul.f32 %v1732, %v1777
        %v1851 = vmul.f32 %v1735, %v1782
        %v1852 = vmul.f32 %v1737, %v1787
        %v1853 = vmul.f32 %v1740, %v1792
        %v1854 = vmul.f32 %v1742, %v1797
        %v1855 = vmul.f32 %v1745, %v1802
        %v1856 = vmul.f32 %v1747, %v1807
        %v1857 = vmul.f32 %v1750, %v1812
        %v1858 = vmul.f32 %v1752, %v1817
        %v1859 = vmul.f32 %v1755, %v1822
        %v1860 = vmul.f32 %v1757, %v1827
        %v1861 = vmul.f32 %v1760, %v1832
        %v1862 = vmul.f32 %v1762, %v1837
        %v1863 = vmul.f32 %v1765, %v1842
        %v1864 = vmul.f32 %v1767, %v1847
        %v1865 = vmax.f32 %v1849, 0.0
        %v1866 = vmax.f32 %v1850, 0.0
        %v1867 = vmax.f32 %v1851, 0.0
        %v1868 = vmax.f32 %v1852, 0.0
        %v1869 = vmax.f32 %v1853, 0.0
        %v1870 = vmax.f32 %v1854, 0.0
        %v1871 = vmax.f32 %v1855, 0.0
        %v1872 = vmax.f32 %v1856, 0.0
        %v1873 = vmax.f32 %v1857, 0.0
        %v1874 = vmax.f32 %v1858, 0.0
        %v1875 = vmax.f32 %v1859, 0.0
        %v1876 = vmax.f32 %v1860, 0.0
        %v1877 = vmax.f32 %v1861, 0.0
        %v1878 = vmax.f32 %v1862, 0.0
        %v1879 = vmax.f32 %v1863, 0.0
        %v1880 = vmax.f32 %v1864, 0.0
        %v1881 = vpack.c.bf16 %v1866, %v1865
        %v1882 = vpack.c.bf16 %v1868, %v1867
        %v1883 = vpack.c.bf16 %v1870, %v1869
        %v1884 = vpack.c.bf16 %v1872, %v1871
        %v1885 = vpack.c.bf16 %v1874, %v1873
        %v1886 = vpack.c.bf16 %v1876, %v1875
        %v1887 = vpack.c.bf16 %v1878, %v1877
        %v1888 = vpack.c.bf16 %v1880, %v1879
        %v1889 = vld [vmem:[%s5] sm:$0xf]
        %v1890 = vld [vmem:[%s5 + $0x4] sm:$0xf]
        %v1891 = vperm.slane %v301, 0
        %v1894 = vunpack.c.l.b16 %v1889
        %v1895 = vunpack.c.l.b16 %v1890
        %v1896 = vpack.c.b16 %v1895, %v1894
        %v1899 = vsel %vm1493, %v1881, 0
        %v1902 = vsel %vm1493, %v1882, 0
        %v1905 = vsel %vm1493, %v1883, 0
        %v1908 = vsel %vm1493, %v1884, 0
        %v1911 = vsel %vm1493, %v1885, 0
        %v1914 = vsel %vm1493, %v1886, 0
        %v1917 = vsel %vm1493, %v1887, 0
        %v1920 = vsel %vm1493, %v1888, 0
        %1922 = vmatpush.bf16.msra.mxu0 0
        %1923 = vmatpush.bf16.msra.mxu0 0
        %1924 = vmatpush.bf16.msra.mxu0 0
        %1925 = vmatpush.bf16.msra.mxu0 0
        %1926 = vmatpush.bf16.msra.mxu0 0
        %1927 = vmatpush.bf16.msra.mxu0 0
        %1928 = vmatpush.bf16.msra.mxu0 0
        %1929 = vmatpush.bf16.msra.mxu0 %v1896
        %1930 = vmatmul.bf16.gmra.mxu0 %v1899
        %v1931 = vpop.f32.mrf.mxu0
        %v1932 = vadd.f32 %v1891, %v1931
        %v1933 = vpop.f32.mrf.mxu0
        %v1934 = vadd.f32 %v1891, %v1933
        %1935 = vmatmul.bf16.gmra.mxu0 %v1902
        %v1936 = vpop.f32.mrf.mxu0
        %v1937 = vadd.f32 %v1891, %v1936
        %v1938 = vpop.f32.mrf.mxu0
        %v1939 = vadd.f32 %v1891, %v1938
        %1940 = vmatmul.bf16.gmra.mxu0 %v1905
        %v1941 = vpop.f32.mrf.mxu0
        %v1942 = vadd.f32 %v1891, %v1941
        %v1943 = vpop.f32.mrf.mxu0
        %v1944 = vadd.f32 %v1891, %v1943
        %1945 = vmatmul.bf16.gmra.mxu0 %v1908
        %v1946 = vpop.f32.mrf.mxu0
        %v1947 = vadd.f32 %v1891, %v1946
        %v1948 = vpop.f32.mrf.mxu0
        %v1949 = vadd.f32 %v1891, %v1948
        %1950 = vmatmul.bf16.gmra.mxu0 %v1911
        %v1951 = vpop.f32.mrf.mxu0
        %v1952 = vadd.f32 %v1891, %v1951
        %v1953 = vpop.f32.mrf.mxu0
        %v1954 = vadd.f32 %v1891, %v1953
        %1955 = vmatmul.bf16.gmra.mxu0 %v1914
        %v1956 = vpop.f32.mrf.mxu0
        %v1957 = vadd.f32 %v1891, %v1956
        %v1958 = vpop.f32.mrf.mxu0
        %v1959 = vadd.f32 %v1891, %v1958
        %1960 = vmatmul.bf16.gmra.mxu0 %v1917
        %v1961 = vpop.f32.mrf.mxu0
        %v1962 = vadd.f32 %v1891, %v1961
        %v1963 = vpop.f32.mrf.mxu0
        %v1964 = vadd.f32 %v1891, %v1963
        %1965 = vmatmul.bf16.gmra.mxu0 %v1920
        %v1966 = vpop.f32.mrf.mxu0
        %v1967 = vadd.f32 %v1891, %v1966
        %v1968 = vpop.f32.mrf.mxu0
        %v1969 = vadd.f32 %v1891, %v1968
        %1970 = vdwg.mxu0
        %1971 = vst [vmem:[%s272] sm:$0xff] %v1932
        %1972 = vst [vmem:[%s272 + $0x8] sm:$0xff] %v1934
        %1973 = vst [vmem:[%s272 + $0x10] sm:$0xff] %v1937
        %1974 = vst [vmem:[%s272 + $0x18] sm:$0xff] %v1939
        %1975 = vst [vmem:[%s272 + $0x20] sm:$0xff] %v1942
        %1976 = vst [vmem:[%s272 + $0x28] sm:$0xff] %v1944
        %1977 = vst [vmem:[%s272 + $0x30] sm:$0xff] %v1947
        %1978 = vst [vmem:[%s272 + $0x38] sm:$0xff] %v1949
        %1979 = vst [vmem:[%s272 + $0x40] sm:$0xff] %v1952
        %1980 = vst [vmem:[%s272 + $0x48] sm:$0xff] %v1954
        %1981 = vst [vmem:[%s272 + $0x50] sm:$0xff] %v1957
        %1982 = vst [vmem:[%s272 + $0x58] sm:$0xff] %v1959
        %1983 = vst [vmem:[%s272 + $0x60] sm:$0xff] %v1962
        %1984 = vst [vmem:[%s272 + $0x68] sm:$0xff] %v1964
        %1985 = vst [vmem:[%s272 + $0x70] sm:$0xff] %v1967
        %1986 = vst [vmem:[%s272 + $0x78] sm:$0xff] %v1969
        %s1987 = sand.u32 %s181, 1
        %s1988 = scalar_lea.sflag [#allocation3], %s1987
        %s1989 = sand.u32 %s181, 1
        %s1990 = smul.addr %s1989, 128
        %s1991 = scalar_lea.vmem [#allocation2], %s1990
        // Predicated region
        $region49: #{tpu_custom_call.1} parent=47 // pred_check
          %p1992 = pneg %p191
        $region50: #{tpu_custom_call.1} parent=47 // pred_check_branch
          %1994 = sbr.rel (%p1992) target = $region52
        $region51: #{tpu_custom_call.1} parent=47 // pred_region
          %s1995 = smul.u32 16, %s21
          %1997 = vsyncadd %s1988, 0
          %s1998 = smul.addr %s1995, 8
          %s1999 = scalar_lea.hbm %s7, %s1998
          %s2000 = sshll.u32 %s1991, 4
          %s2001 = int_to_ptr.vmem [resolvable:$true] %s2000
          %s2002 = sshll.u32 %s1999, 4
          %s2003 = int_to_ptr.hbm [resolvable:$true] %s2002
          %2008 = dma.vmem_to_hbm [thread:$0]  %s2001, 2048, %s2003, %s1988, 128, 128, 8
        $region52: #{tpu_custom_call.1} parent=47 // pred_fallthru
          _
      $region48: #{tpu_custom_call.1} parent=5 // pred_fallthru
        _
      %p2009 = scmp.le.s32.totalorder 2, %s16
      // Predicated region
      $region53: #{tpu_custom_call.1} parent=5 // pred_check
        %p2010 = pneg %p2009
      $region54: #{tpu_custom_call.1} parent=5 // pred_check_branch
        %2012 = sbr.rel (%p2010) target = $region56
      $region55: #{tpu_custom_call.1} parent=5 // pred_region
        %s2013 = ssub.s32 %s16, 2
        // Predicated region
        $region57: #{tpu_custom_call.1} parent=55 // pred_check
          %p2014 = pneg %p197
        $region58: #{tpu_custom_call.1} parent=55 // pred_check_branch
          %2016 = sbr.rel (%p2014) target = $region60
        $region59: #{tpu_custom_call.1} parent=55 // pred_region
          %s2017 = sand.u32 %s182, 1
          %s2018 = scalar_lea.sflag [#allocation3], %s2017
          %s2019 = sand.u32 %s182, 1
          %s2020 = smul.addr %s2019, 128
          %s2021 = scalar_lea.vmem [#allocation2], %s2020
          %2023 = dma.done %s2018, 2048
        $region60: #{tpu_custom_call.1} parent=55 // pred_fallthru
          _
      $region56: #{tpu_custom_call.1} parent=5 // pred_fallthru
        _
    $region6: #{tpu_custom_call.1} parent=1 // loop_footer
      %s20 = sadd.s32 1, %s16
    $region7: #{tpu_custom_call.1} parent=1 // loop_footer_branch
      %15 = sbr.rel target = $region3
    $region8: #{tpu_custom_call.1} parent=1 // loop_exit
      _
    %2024 = vsyncpa [#allocation3], 1
    %s2025 = scalar_lea.sflag [#allocation3], 1
    %2026 = vsyncpa %s2025, 1

</llo_original>
